<compile_context>
chip_gen: v5e
topology: v5e:2x2
jax: 0.10.0
libtpu: 0.0.40
codegen_flags: <defaults>
</compile_context>

<pallas_src>
import jax
import jax.numpy as jnp
from jax import lax
from jax.experimental import pallas as pl
from jax.experimental.pallas import tpu as pltpu


def _round_up(a, m):
    return (a + m - 1) // m * m


def p_cnn_kernel(x_ref, wcat_ref, shift_ref, wfc_ref, bfc_ref, out_ref):
    # x_ref:     (1, (T+2)*Bblk, Cin_p)  bf16 batch-block of time-padded input,
    #            rows ordered as r = t_pad*Bblk + b_local
    # wcat_ref:  (Cin_p, 3*Cout)         bf16, 3 conv taps (BN-folded) along N
    # shift_ref: (1, Cout)               f32 folded conv-bias + BN shift
    # wfc_ref:   (T, Cout, Nout_p)       bf16 fc2 weight in (t, c) order
    # bfc_ref:   (1, Nout_p)             f32 fc2 bias (zero-padded)
    # out_ref:   (Bblk, Nout_p)          f32
    T = wfc_ref.shape[0]
    bblk, nout_p = out_ref.shape
    cout = shift_ref.shape[1]

    x2d = x_ref[0]                                    # ((T+2)*Bblk, Cin_p) bf16

    # Conv1d(k=3, s=1, p=1) as ONE MXU matmul with the taps concatenated
    # along N (N = 3*Cout = 384 fills the 256-wide v6e/v7x MXU).
    z = jnp.dot(x2d, wcat_ref[...], preferred_element_type=jnp.float32)

    n_rows = T * bblk
    # tap select = lane slice at 128-multiples (free); time shift = row slice
    # at Bblk-multiples (Bblk % 8 == 0 -> sublane aligned, free).
    y = (z[0:n_rows, 0:cout]
         + z[bblk:bblk + n_rows, cout:2 * cout]
         + z[2 * bblk:2 * bblk + n_rows, 2 * cout:3 * cout])

    # Folded (conv bias + eval-mode BatchNorm) + ReLU epilogue in f32,
    # then cast to bf16 for the fc2 MXU matmuls.
    # TODO(synk): training-mode BN (batch statistics) is not reproduced here.
    y = jnp.maximum(y + shift_ref[...], 0.0).astype(jnp.bfloat16)

    # fc2 over the flattened (Cout*T) features: per-t slabs of y are whole
    # aligned vreg rows; each matmul has M = Bblk and a lane-dense 128-wide RHS.
    # (Merging the T matmuls into one K = T*Cout matmul via an in-kernel
    # transpose is a possible further win on v6e/v7x but fc2 is ~5% of FLOPs.)
    acc = jnp.zeros((bblk, nout_p), jnp.float32)
    for t in range(T):                                # static unroll, small T
        acc = acc + jnp.dot(y[t * bblk:(t + 1) * bblk, :], wfc_ref[t],
                            preferred_element_type=jnp.float32)
    out_ref[...] = acc + bfc_ref[...]


def p_cnn_forward(x, conv_w, conv_b, bn_gamma, bn_beta, bn_mean, bn_var,
                  fc_w, fc_b, eps=1e-5):
    """x: (B, T, Cin) float32. Returns (1, B, Nout) matching PyTorch."""
    B, T, Cin = x.shape
    Cout = conv_w.shape[2]
    Nout = fc_w.shape[0]

    Cin_p = _round_up(Cin, 128)
    Nout_p = _round_up(Nout, 128)

    # ---- batch-block sizing: as big as a ~32 MiB VMEM budget allows (caps at
    # 512), but small enough that the grid has >= 2 steps when B allows so both
    # v7x TensorCores are used. ----
    def vmem_est(bblk):
        xblk = (T + 2) * bblk * Cin_p * 2            # bf16 input block
        z = (T + 2) * bblk * 3 * Cout * 4            # f32 conv matmul result
        y = T * bblk * Cout * 6                      # f32 + bf16 copies of y
        oacc = 3 * bblk * Nout_p * 4                 # acc + out block x2
        w = (Cin_p * 3 * Cout * 2 + T * Cout * Nout_p * 2
             + (Cout + Nout_p) * 8)
        return 2 * xblk + z + y + oacc + 2 * w       # x double-buffered

    budget = 32 * 1024 * 1024
    Bblk = min(512, _round_up(max(1, (B + 1) // 2), 8))
    while Bblk > 8 and vmem_est(Bblk) > budget:
        Bblk -= 8
    B_p = _round_up(B, Bblk)
    nblk = B_p // Bblk
    vmem_limit = int(max(32 * 1024 * 1024,
                         min(vmem_est(Bblk) + 16 * 1024 * 1024,
                             56 * 1024 * 1024)))

    # ---- parameter folding / relayout (plain JAX glue, one-time cost) ----
    scale = bn_gamma / jnp.sqrt(bn_var + eps)                      # (Cout,)
    w_fold = conv_w * scale[None, None, :]                         # (3,Cin,Cout)
    w_fold = jnp.pad(w_fold, ((0, 0), (0, Cin_p - Cin), (0, 0)))
    # taps concatenated along N so the conv is a single (Cin_p x 3*Cout) matmul
    w_cat = jnp.concatenate([w_fold[0], w_fold[1], w_fold[2]],
                            axis=1).astype(jnp.bfloat16)            # (Cin_p,384)
    shift = (conv_b * scale + bn_beta
             - bn_mean * scale).reshape(1, Cout).astype(jnp.float32)

    # torch flatten(1) of (B, Cout, T) puts feature (c, t) at index c*T + t;
    # rearrange fc weight to (t, c) contraction order, pad Nout lane-dense.
    wfc = fc_w.reshape(Nout, Cout, T).transpose(2, 1, 0)            # (T,Cout,Nout)
    wfc = jnp.pad(wfc, ((0, 0), (0, 0),
                        (0, Nout_p - Nout))).astype(jnp.bfloat16)
    bfc = jnp.pad(fc_b, (0, Nout_p - Nout)).reshape(1, Nout_p).astype(jnp.float32)

    # Input relayout: cast to bf16 (halves HBM traffic of this copy and of the
    # kernel's reads), pad batch/time/channels, regroup per batch block with
    # row index r = t_pad*Bblk + b_local so all in-kernel shifts stay aligned.
    # TODO(synk): in a real pipeline this single copy should be fused into the
    # upstream producer of x (or replaced by a time-blocked BlockSpec) to avoid
    # the extra HBM pass over the activations.
    x_p = jnp.pad(x.astype(jnp.bfloat16),
                  ((0, B_p - B), (1, 1), (0, Cin_p - Cin)))         # (B_p,T+2,Cin_p)
    x_arr = (x_p.reshape(nblk, Bblk, T + 2, Cin_p)
             .transpose(0, 2, 1, 3)
             .reshape(nblk, (T + 2) * Bblk, Cin_p))

    out = pl.pallas_call(
        p_cnn_kernel,
        out_shape=jax.ShapeDtypeStruct((B_p, Nout_p), jnp.float32),
        grid_spec=pltpu.PrefetchScalarGridSpec(
            num_scalar_prefetch=0,
            grid=(nblk,),
            in_specs=[
                pl.BlockSpec((1, (T + 2) * Bblk, Cin_p), lambda g: (g, 0, 0)),
                pl.BlockSpec((Cin_p, 3 * Cout), lambda g: (0, 0)),
                pl.BlockSpec((1, Cout), lambda g: (0, 0)),
                pl.BlockSpec((T, Cout, Nout_p), lambda g: (0, 0, 0)),
                pl.BlockSpec((1, Nout_p), lambda g: (0, 0)),
            ],
            out_specs=pl.BlockSpec((Bblk, Nout_p), lambda g: (g, 0)),
        ),
        compiler_params=pltpu.CompilerParams(
            dimension_semantics=("parallel",),
            vmem_limit_bytes=vmem_limit),
    )(x_arr, w_cat, shift, wfc, bfc)

    # slice away batch / Nout padding; (B, Nout) -> (1, B, Nout).
    return out[:B, :Nout][None]


def reference_forward(x, conv_w, conv_b, gamma, beta, mean, var, fc_w, fc_b,
                      eps=1e-5):
    """Pure-JAX f32 reference with the same (eval-mode) semantics."""
    B, T, Cin = x.shape
    Cout = conv_w.shape[2]
    x_pad = jnp.pad(x, ((0, 0), (1, 1), (0, 0)))
    y = jnp.zeros((B, T, Cout), jnp.float32)
    for k in range(3):
        y = y + jnp.einsum("btc,co->bto", x_pad[:, k:k + T, :], conv_w[k],
                           precision=lax.Precision.HIGHEST)
    y = y + conv_b
    y = (y - mean) / jnp.sqrt(var + eps) * gamma + beta
    y = jnp.maximum(y, 0.0)
    feat = jnp.transpose(y, (0, 2, 1)).reshape(B, -1)  # flatten as c*T + t
    out = jnp.dot(feat, fc_w.T, precision=lax.Precision.HIGHEST) + fc_b
    return out[None]


if __name__ == "__main__":
    B, T, Cin, Cout, Nout = 2, 8, 700, 128, 20

    key = jax.random.PRNGKey(0)
    ks = jax.random.split(key, 9)
    x = jax.random.normal(ks[0], (B, T, Cin), jnp.float32)
    # Conv weight stored as (3, Cin, Cout) == torch weight (Cout, Cin, 3)
    # with axes (k, c, o).
    conv_w = jax.random.normal(ks[1], (3, Cin, Cout), jnp.float32) * 0.02
    conv_b = jax.random.normal(ks[2], (Cout,), jnp.float32) * 0.1
    bn_gamma = 1.0 + 0.1 * jax.random.normal(ks[3], (Cout,), jnp.float32)
    bn_beta = 0.1 * jax.random.normal(ks[4], (Cout,), jnp.float32)
    bn_mean = 0.1 * jax.random.normal(ks[5], (Cout,), jnp.float32)
    bn_var = 0.9 + 0.1 * jnp.abs(jax.random.normal(ks[6], (Cout,), jnp.float32))
    fc_w = jax.random.normal(ks[7], (Nout, Cout * T), jnp.float32) * 0.02
    fc_b = 0.1 * jax.random.normal(ks[8], (Nout,), jnp.float32)

    out = p_cnn_forward(x, conv_w, conv_b, bn_gamma, bn_beta, bn_mean, bn_var,
                        fc_w, fc_b)
    out = jax.block_until_ready(out)

    ref = reference_forward(x, conv_w, conv_b, bn_gamma, bn_beta, bn_mean,
                            bn_var, fc_w, fc_b)
    assert out.shape == (1, B, Nout), out.shape
    # bf16 MXU operands (f32 accumulation) -> loosened tolerance per review.
    assert jnp.allclose(out, ref, atol=5e-2, rtol=5e-2), (
        float(jnp.max(jnp.abs(out - ref))))

    print("KERNEL_OK")
</pallas_src>

<mosaic_0001>
module attributes {stable_mosaic.version = 11 : i64} {
  func.func @p_cnn_kernel(%arg0: i32, %arg1: memref<1x80x768xbf16, #tpu.memory_space<vmem>>, %arg2: memref<768x384xbf16, #tpu.memory_space<vmem>>, %arg3: memref<1x128xf32, #tpu.memory_space<vmem>>, %arg4: memref<8x128x128xbf16, #tpu.memory_space<vmem>>, %arg5: memref<1x128xf32, #tpu.memory_space<vmem>>, %arg6: memref<8x128xf32, #tpu.memory_space<vmem>>) attributes {dimension_semantics = [#tpu.dimension_semantics<parallel>], iteration_bounds = array<i64: 1>, scalar_prefetch = 0 : i64, scratch_operands = 0 : i64, tpu.core_type = #tpu.core_type<tc>, window_params = [{transform_indices = @transform_0, window_bounds = array<i64: 1, 80, 768>}, {pipeline_mode = #tpu.pipeline_mode<synchronous>, transform_indices = @transform_1, window_bounds = array<i64: 768, 384>}, {pipeline_mode = #tpu.pipeline_mode<synchronous>, transform_indices = @transform_2, window_bounds = array<i64: 1, 128>}, {pipeline_mode = #tpu.pipeline_mode<synchronous>, transform_indices = @transform_3, window_bounds = array<i64: 8, 128, 128>}, {pipeline_mode = #tpu.pipeline_mode<synchronous>, transform_indices = @transform_4, window_bounds = array<i64: 1, 128>}, {transform_indices = @transform_5, window_bounds = array<i64: 8, 128>}]} {
    %c0 = arith.constant 0 : index
    %c0_0 = arith.constant 0 : index
    %c0_1 = arith.constant 0 : index
    %0 = vector.load %arg1[%c0, %c0_0, %c0_1] : memref<1x80x768xbf16, #tpu.memory_space<vmem>>, vector<1x80x768xbf16>
    %1 = vector.shape_cast %0 : vector<1x80x768xbf16> to vector<80x768xbf16>
    %c0_2 = arith.constant 0 : index
    %c0_3 = arith.constant 0 : index
    %2 = vector.load %arg2[%c0_2, %c0_3] : memref<768x384xbf16, #tpu.memory_space<vmem>>, vector<768x384xbf16>
    %cst = arith.constant dense<0.000000e+00> : vector<80x384xf32>
    %3 = tpu.matmul %1, %2, %cst {dimension_numbers = #tpu.dot_dimension_numbers<[1], [0], [0], [1], [0, 0, 1, 1], [], []>} : vector<80x768xbf16>, vector<768x384xbf16>, vector<80x384xf32> -> vector<80x384xf32>
    %4 = vector.extract_strided_slice %3 {offsets = [0, 0], sizes = [64, 128], strides = [1, 1]} : vector<80x384xf32> to vector<64x128xf32>
    %5 = vector.extract_strided_slice %3 {offsets = [8, 128], sizes = [64, 128], strides = [1, 1]} : vector<80x384xf32> to vector<64x128xf32>
    %6 = arith.addf %4, %5 : vector<64x128xf32>
    %7 = vector.extract_strided_slice %3 {offsets = [16, 256], sizes = [64, 128], strides = [1, 1]} : vector<80x384xf32> to vector<64x128xf32>
    %8 = arith.addf %6, %7 : vector<64x128xf32>
    %c0_4 = arith.constant 0 : index
    %c0_5 = arith.constant 0 : index
    %9 = vector.load %arg3[%c0_4, %c0_5] : memref<1x128xf32, #tpu.memory_space<vmem>>, vector<1x128xf32>
    %10 = vector.broadcast %9 : vector<1x128xf32> to vector<64x128xf32>
    %11 = arith.addf %8, %10 : vector<64x128xf32>
    %cst_6 = arith.constant 0.000000e+00 : f32
    %12 = vector.broadcast %cst_6 : f32 to vector<64x128xf32>
    %13 = arith.maximumf %11, %12 : vector<64x128xf32>
    %14 = arith.truncf %13 : vector<64x128xf32> to vector<64x128xbf16>
    %cst_7 = arith.constant 0.000000e+00 : f32
    %15 = vector.broadcast %cst_7 : f32 to vector<8x128xf32>
    %16 = vector.extract_strided_slice %14 {offsets = [0, 0], sizes = [8, 128], strides = [1, 1]} : vector<64x128xbf16> to vector<8x128xbf16>
    %c0_8 = arith.constant 0 : index
    %c0_9 = arith.constant 0 : index
    %c0_10 = arith.constant 0 : index
    %17 = vector.load %arg4[%c0_8, %c0_9, %c0_10] : memref<8x128x128xbf16, #tpu.memory_space<vmem>>, vector<1x128x128xbf16>
    %18 = vector.shape_cast %17 : vector<1x128x128xbf16> to vector<128x128xbf16>
    %cst_11 = arith.constant dense<0.000000e+00> : vector<8x128xf32>
    %19 = tpu.matmul %16, %18, %cst_11 {dimension_numbers = #tpu.dot_dimension_numbers<[1], [0], [0], [1], [0, 0, 1, 1], [], []>} : vector<8x128xbf16>, vector<128x128xbf16>, vector<8x128xf32> -> vector<8x128xf32>
    %20 = arith.addf %15, %19 : vector<8x128xf32>
    %21 = vector.extract_strided_slice %14 {offsets = [8, 0], sizes = [8, 128], strides = [1, 1]} : vector<64x128xbf16> to vector<8x128xbf16>
    %c1 = arith.constant 1 : index
    %c0_12 = arith.constant 0 : index
    %c0_13 = arith.constant 0 : index
    %22 = vector.load %arg4[%c1, %c0_12, %c0_13] : memref<8x128x128xbf16, #tpu.memory_space<vmem>>, vector<1x128x128xbf16>
    %23 = vector.shape_cast %22 : vector<1x128x128xbf16> to vector<128x128xbf16>
    %cst_14 = arith.constant dense<0.000000e+00> : vector<8x128xf32>
    %24 = tpu.matmul %21, %23, %cst_14 {dimension_numbers = #tpu.dot_dimension_numbers<[1], [0], [0], [1], [0, 0, 1, 1], [], []>} : vector<8x128xbf16>, vector<128x128xbf16>, vector<8x128xf32> -> vector<8x128xf32>
    %25 = arith.addf %20, %24 : vector<8x128xf32>
    %26 = vector.extract_strided_slice %14 {offsets = [16, 0], sizes = [8, 128], strides = [1, 1]} : vector<64x128xbf16> to vector<8x128xbf16>
    %c2 = arith.constant 2 : index
    %c0_15 = arith.constant 0 : index
    %c0_16 = arith.constant 0 : index
    %27 = vector.load %arg4[%c2, %c0_15, %c0_16] : memref<8x128x128xbf16, #tpu.memory_space<vmem>>, vector<1x128x128xbf16>
    %28 = vector.shape_cast %27 : vector<1x128x128xbf16> to vector<128x128xbf16>
    %cst_17 = arith.constant dense<0.000000e+00> : vector<8x128xf32>
    %29 = tpu.matmul %26, %28, %cst_17 {dimension_numbers = #tpu.dot_dimension_numbers<[1], [0], [0], [1], [0, 0, 1, 1], [], []>} : vector<8x128xbf16>, vector<128x128xbf16>, vector<8x128xf32> -> vector<8x128xf32>
    %30 = arith.addf %25, %29 : vector<8x128xf32>
    %31 = vector.extract_strided_slice %14 {offsets = [24, 0], sizes = [8, 128], strides = [1, 1]} : vector<64x128xbf16> to vector<8x128xbf16>
    %c3 = arith.constant 3 : index
    %c0_18 = arith.constant 0 : index
    %c0_19 = arith.constant 0 : index
    %32 = vector.load %arg4[%c3, %c0_18, %c0_19] : memref<8x128x128xbf16, #tpu.memory_space<vmem>>, vector<1x128x128xbf16>
    %33 = vector.shape_cast %32 : vector<1x128x128xbf16> to vector<128x128xbf16>
    %cst_20 = arith.constant dense<0.000000e+00> : vector<8x128xf32>
    %34 = tpu.matmul %31, %33, %cst_20 {dimension_numbers = #tpu.dot_dimension_numbers<[1], [0], [0], [1], [0, 0, 1, 1], [], []>} : vector<8x128xbf16>, vector<128x128xbf16>, vector<8x128xf32> -> vector<8x128xf32>
    %35 = arith.addf %30, %34 : vector<8x128xf32>
    %36 = vector.extract_strided_slice %14 {offsets = [32, 0], sizes = [8, 128], strides = [1, 1]} : vector<64x128xbf16> to vector<8x128xbf16>
    %c4 = arith.constant 4 : index
    %c0_21 = arith.constant 0 : index
    %c0_22 = arith.constant 0 : index
    %37 = vector.load %arg4[%c4, %c0_21, %c0_22] : memref<8x128x128xbf16, #tpu.memory_space<vmem>>, vector<1x128x128xbf16>
    %38 = vector.shape_cast %37 : vector<1x128x128xbf16> to vector<128x128xbf16>
    %cst_23 = arith.constant dense<0.000000e+00> : vector<8x128xf32>
    %39 = tpu.matmul %36, %38, %cst_23 {dimension_numbers = #tpu.dot_dimension_numbers<[1], [0], [0], [1], [0, 0, 1, 1], [], []>} : vector<8x128xbf16>, vector<128x128xbf16>, vector<8x128xf32> -> vector<8x128xf32>
    %40 = arith.addf %35, %39 : vector<8x128xf32>
    %41 = vector.extract_strided_slice %14 {offsets = [40, 0], sizes = [8, 128], strides = [1, 1]} : vector<64x128xbf16> to vector<8x128xbf16>
    %c5 = arith.constant 5 : index
    %c0_24 = arith.constant 0 : index
    %c0_25 = arith.constant 0 : index
    %42 = vector.load %arg4[%c5, %c0_24, %c0_25] : memref<8x128x128xbf16, #tpu.memory_space<vmem>>, vector<1x128x128xbf16>
    %43 = vector.shape_cast %42 : vector<1x128x128xbf16> to vector<128x128xbf16>
    %cst_26 = arith.constant dense<0.000000e+00> : vector<8x128xf32>
    %44 = tpu.matmul %41, %43, %cst_26 {dimension_numbers = #tpu.dot_dimension_numbers<[1], [0], [0], [1], [0, 0, 1, 1], [], []>} : vector<8x128xbf16>, vector<128x128xbf16>, vector<8x128xf32> -> vector<8x128xf32>
    %45 = arith.addf %40, %44 : vector<8x128xf32>
    %46 = vector.extract_strided_slice %14 {offsets = [48, 0], sizes = [8, 128], strides = [1, 1]} : vector<64x128xbf16> to vector<8x128xbf16>
    %c6 = arith.constant 6 : index
    %c0_27 = arith.constant 0 : index
    %c0_28 = arith.constant 0 : index
    %47 = vector.load %arg4[%c6, %c0_27, %c0_28] : memref<8x128x128xbf16, #tpu.memory_space<vmem>>, vector<1x128x128xbf16>
    %48 = vector.shape_cast %47 : vector<1x128x128xbf16> to vector<128x128xbf16>
    %cst_29 = arith.constant dense<0.000000e+00> : vector<8x128xf32>
    %49 = tpu.matmul %46, %48, %cst_29 {dimension_numbers = #tpu.dot_dimension_numbers<[1], [0], [0], [1], [0, 0, 1, 1], [], []>} : vector<8x128xbf16>, vector<128x128xbf16>, vector<8x128xf32> -> vector<8x128xf32>
    %50 = arith.addf %45, %49 : vector<8x128xf32>
    %51 = vector.extract_strided_slice %14 {offsets = [56, 0], sizes = [8, 128], strides = [1, 1]} : vector<64x128xbf16> to vector<8x128xbf16>
    %c7 = arith.constant 7 : index
    %c0_30 = arith.constant 0 : index
    %c0_31 = arith.constant 0 : index
    %52 = vector.load %arg4[%c7, %c0_30, %c0_31] : memref<8x128x128xbf16, #tpu.memory_space<vmem>>, vector<1x128x128xbf16>
    %53 = vector.shape_cast %52 : vector<1x128x128xbf16> to vector<128x128xbf16>
    %cst_32 = arith.constant dense<0.000000e+00> : vector<8x128xf32>
    %54 = tpu.matmul %51, %53, %cst_32 {dimension_numbers = #tpu.dot_dimension_numbers<[1], [0], [0], [1], [0, 0, 1, 1], [], []>} : vector<8x128xbf16>, vector<128x128xbf16>, vector<8x128xf32> -> vector<8x128xf32>
    %55 = arith.addf %50, %54 : vector<8x128xf32>
    %c0_33 = arith.constant 0 : index
    %c0_34 = arith.constant 0 : index
    %56 = vector.load %arg5[%c0_33, %c0_34] : memref<1x128xf32, #tpu.memory_space<vmem>>, vector<1x128xf32>
    %57 = vector.broadcast %56 : vector<1x128xf32> to vector<8x128xf32>
    %58 = arith.addf %55, %57 : vector<8x128xf32>
    %c0_35 = arith.constant 0 : index
    %c0_36 = arith.constant 0 : index
    %59 = vector.load %arg6[%c0_35, %c0_36] : memref<8x128xf32, #tpu.memory_space<vmem>>, vector<8x128xf32>
    tpu.vector_store %arg6[%c0_35, %c0_36], %58 {strides = array<i32>} : memref<8x128xf32, #tpu.memory_space<vmem>>, vector<8x128xf32>,
    return
  }
  func.func @transform_0(%arg0: i32) -> (i32, i32, i32) {
    %c0_i32 = arith.constant 0 : i32
    %c0_i32_0 = arith.constant 0 : i32
    %c0_i32_1 = arith.constant 0 : i32
    return %arg0, %c0_i32, %c0_i32_0 : i32, i32, i32
  }
  func.func @transform_1(%arg0: i32) -> (i32, i32) {
    %c0_i32 = arith.constant 0 : i32
    %c0_i32_0 = arith.constant 0 : i32
    %c0_i32_1 = arith.constant 0 : i32
    return %c0_i32, %c0_i32_0 : i32, i32
  }
  func.func @transform_2(%arg0: i32) -> (i32, i32) {
    %c0_i32 = arith.constant 0 : i32
    %c0_i32_0 = arith.constant 0 : i32
    %c0_i32_1 = arith.constant 0 : i32
    return %c0_i32, %c0_i32_0 : i32, i32
  }
  func.func @transform_3(%arg0: i32) -> (i32, i32, i32) {
    %c0_i32 = arith.constant 0 : i32
    %c0_i32_0 = arith.constant 0 : i32
    %c0_i32_1 = arith.constant 0 : i32
    %c0_i32_2 = arith.constant 0 : i32
    return %c0_i32, %c0_i32_0, %c0_i32_1 : i32, i32, i32
  }
  func.func @transform_4(%arg0: i32) -> (i32, i32) {
    %c0_i32 = arith.constant 0 : i32
    %c0_i32_0 = arith.constant 0 : i32
    %c0_i32_1 = arith.constant 0 : i32
    return %c0_i32, %c0_i32_0 : i32, i32
  }
  func.func @transform_5(%arg0: i32) -> (i32, i32) {
    %c0_i32 = arith.constant 0 : i32
    %c0_i32_0 = arith.constant 0 : i32
    return %arg0, %c0_i32 : i32, i32
  }
}

</mosaic_0001>

<llo_original>
// kernel: tpu_custom_call.1
$region0: #{tpu_custom_call.1}
  #allocation0 [shape = 'u32[]', space=smem, size = 0x4, offset = 0x4, fixed_abs, tag = 'smem constant byte address 0x4 - core index']
  #allocation1 [shape = 'u32[72,128]{1,0:T(1,128)}', space=vmem, size = 0x9000, scoped, tag = 'internal scratch']
  %s0 = inlined_call_operand.hbm [shape: bf16[1,80,768], index: 0, kind: input, shape index: {}]
  %s1 = inlined_call_operand.hbm [shape: bf16[768,384], index: 1, kind: input, shape index: {}]
  %s2 = inlined_call_operand.vmem [shape: f32[1,128], index: 2, kind: input, shape index: {}]
  %s3 = inlined_call_operand.hbm [shape: bf16[8,128,128], index: 3, kind: input, shape index: {}]
  %s4 = inlined_call_operand.vmem [shape: f32[1,128], index: 4, kind: input, shape index: {}]
  %s5 = inlined_call_operand.hbm [shape: f32[8,128], index: 5, kind: output, shape index: {}]
  %s6 = sld [smem:[#allocation0]]
  $region42: #{tpu_custom_call.1} parent=0
    _
  %s8 = ssub.s32 1, %s6
  %s9 = scalar_select 0, %s8, %s6
  $region1: #{tpu_custom_call.1} parent=0
    #allocation2 [shape = 'u8[122880]{0}', space=vmem, size = 0x1e000, scoped, tag = 'input window, operand 0, single buffered']
    #allocation3 [shape = 's32[1]{0}', space=sflag, size = 0x4, scoped, tag = 'scoped memory for tpu_custom_call.1']
    #allocation4 [shape = 's32[1]{0}', space=sflag, size = 0x4, scoped, tag = 'scoped memory for tpu_custom_call.1']
    #allocation5 [shape = 'u8[589824]{0}', space=vmem, size = 0x90000, scoped, tag = 'input window, operand 1, single buffered']
    #allocation6 [shape = 's32[1]{0}', space=sflag, size = 0x4, scoped, tag = 'scoped memory for tpu_custom_call.1']
    #allocation7 [shape = 'u8[262144]{0}', space=vmem, size = 0x40000, scoped, tag = 'input window, operand 3, single buffered']
    #allocation8 [shape = 'u8[4096]{0}', space=vmem, size = 0x1000, scoped, tag = 'output window, operand 0, single buffered']
    %10 = vsyncpa [#allocation3], 0
    %11 = vsyncpa [#allocation6], 0
    %12 = vsyncpa [#allocation4], 0
    // Predicated region
    $region2: #{tpu_custom_call.1} parent=1 // pred_check
      _
    $region3: #{tpu_custom_call.1} parent=1 // pred_check_branch
      %14 = sbr.rel (0) target = $region5
    $region4: #{tpu_custom_call.1} parent=1 // pred_region
      %16 = vsyncadd [#allocation3], 0
      %s17 = sshll.u32 %s0, 4
      %s18 = int_to_ptr.hbm [resolvable:$true] %s17
      %s19 = sshll.u32 [#allocation2], 4
      %s20 = int_to_ptr.vmem [resolvable:$true] %s19
      %25 = dma.hbm_to_vmem [thread:$0]  %s18, 3840, %s20, [#allocation3], 384, 384, 24
    $region5: #{tpu_custom_call.1} parent=1 // pred_fallthru
      _
    // Predicated region
    $region6: #{tpu_custom_call.1} parent=1 // pred_check
      _
    $region7: #{tpu_custom_call.1} parent=1 // pred_check_branch
      %27 = sbr.rel (0) target = $region9
    $region8: #{tpu_custom_call.1} parent=1 // pred_region
      %29 = vsyncadd [#allocation6], 0
      %s30 = sshll.u32 %s1, 4
      %s31 = int_to_ptr.hbm [resolvable:$true] %s30
      %s32 = sshll.u32 [#allocation5], 4
      %s33 = int_to_ptr.vmem [resolvable:$true] %s32
      %38 = dma.hbm_to_vmem [thread:$0]  %s31, 18432, %s33, [#allocation6], 192, 192, 12
    $region9: #{tpu_custom_call.1} parent=1 // pred_fallthru
      _
    // Predicated region
    $region10: #{tpu_custom_call.1} parent=1 // pred_check
      _
    $region11: #{tpu_custom_call.1} parent=1 // pred_check_branch
      %40 = sbr.rel (0) target = $region13
    $region12: #{tpu_custom_call.1} parent=1 // pred_region
      _
    $region13: #{tpu_custom_call.1} parent=1 // pred_fallthru
      _
    // Predicated region
    $region14: #{tpu_custom_call.1} parent=1 // pred_check
      _
    $region15: #{tpu_custom_call.1} parent=1 // pred_check_branch
      %42 = sbr.rel (0) target = $region17
    $region16: #{tpu_custom_call.1} parent=1 // pred_region
      %44 = vsyncadd [#allocation6], 0
      %s45 = sshll.u32 %s3, 4
      %s46 = int_to_ptr.hbm [resolvable:$true] %s45
      %s47 = sshll.u32 [#allocation7], 4
      %s48 = int_to_ptr.vmem [resolvable:$true] %s47
      %53 = dma.hbm_to_vmem [thread:$0]  %s46, 8192, %s48, [#allocation6], 64, 64, 4
    $region17: #{tpu_custom_call.1} parent=1 // pred_fallthru
      _
    // Predicated region
    $region18: #{tpu_custom_call.1} parent=1 // pred_check
      _
    $region19: #{tpu_custom_call.1} parent=1 // pred_check_branch
      %55 = sbr.rel (0) target = $region21
    $region20: #{tpu_custom_call.1} parent=1 // pred_region
      _
    $region21: #{tpu_custom_call.1} parent=1 // pred_fallthru
      _
    // Predicated region
    $region22: #{tpu_custom_call.1} parent=1 // pred_check
      _
    $region23: #{tpu_custom_call.1} parent=1 // pred_check_branch
      %57 = sbr.rel (0) target = $region25
    $region24: #{tpu_custom_call.1} parent=1 // pred_region
      %59 = dma.done [#allocation3], 3840
    $region25: #{tpu_custom_call.1} parent=1 // pred_fallthru
      _
    // Predicated region
    $region26: #{tpu_custom_call.1} parent=1 // pred_check
      _
    $region27: #{tpu_custom_call.1} parent=1 // pred_check_branch
      %61 = sbr.rel (0) target = $region29
    $region28: #{tpu_custom_call.1} parent=1 // pred_region
      %63 = dma.done [#allocation6], 18432
    $region29: #{tpu_custom_call.1} parent=1 // pred_fallthru
      _
    // Predicated region
    $region30: #{tpu_custom_call.1} parent=1 // pred_check
      _
    $region31: #{tpu_custom_call.1} parent=1 // pred_check_branch
      %65 = sbr.rel (0) target = $region33
    $region32: #{tpu_custom_call.1} parent=1 // pred_region
      %67 = dma.done [#allocation6], 8192
    $region33: #{tpu_custom_call.1} parent=1 // pred_fallthru
      _
    %v68 = vld [vmem:[#allocation2] sm:$0xff]
    %v69 = vld [vmem:[#allocation2 + $0x8] sm:$0xff]
    %v70 = vld [vmem:[#allocation2 + $0x10] sm:$0xff]
    %v71 = vld [vmem:[#allocation2 + $0x18] sm:$0xff]
    %v72 = vld [vmem:[#allocation2 + $0x20] sm:$0xff]
    %v73 = vld [vmem:[#allocation2 + $0x28] sm:$0xff]
    %v74 = vld [vmem:[#allocation2 + $0x30] sm:$0xff]
    %v75 = vld [vmem:[#allocation2 + $0x38] sm:$0xff]
    %v76 = vld [vmem:[#allocation2 + $0x40] sm:$0xff]
    %v77 = vld [vmem:[#allocation2 + $0x48] sm:$0xff]
    %v78 = vld [vmem:[#allocation2 + $0x50] sm:$0xff]
    %v79 = vld [vmem:[#allocation2 + $0x58] sm:$0xff]
    %v80 = vld [vmem:[#allocation2 + $0x60] sm:$0xff]
    %v81 = vld [vmem:[#allocation2 + $0x68] sm:$0xff]
    %v82 = vld [vmem:[#allocation2 + $0x70] sm:$0xff]
    %v83 = vld [vmem:[#allocation2 + $0x78] sm:$0xff]
    %v84 = vld [vmem:[#allocation2 + $0x80] sm:$0xff]
    %v85 = vld [vmem:[#allocation2 + $0x88] sm:$0xff]
    %v86 = vld [vmem:[#allocation2 + $0x90] sm:$0xff]
    %v87 = vld [vmem:[#allocation2 + $0x98] sm:$0xff]
    %v88 = vld [vmem:[#allocation2 + $0xa0] sm:$0xff]
    %v89 = vld [vmem:[#allocation2 + $0xa8] sm:$0xff]
    %v90 = vld [vmem:[#allocation2 + $0xb0] sm:$0xff]
    %v91 = vld [vmem:[#allocation2 + $0xb8] sm:$0xff]
    %v92 = vld [vmem:[#allocation2 + $0xc0] sm:$0xff]
    %v93 = vld [vmem:[#allocation2 + $0xc8] sm:$0xff]
    %v94 = vld [vmem:[#allocation2 + $0xd0] sm:$0xff]
    %v95 = vld [vmem:[#allocation2 + $0xd8] sm:$0xff]
    %v96 = vld [vmem:[#allocation2 + $0xe0] sm:$0xff]
    %v97 = vld [vmem:[#allocation2 + $0xe8] sm:$0xff]
    %v98 = vld [vmem:[#allocation5] sm:$0xff]
    %v99 = vld [vmem:[#allocation5 + $0x8] sm:$0xf]
    %v100 = vld [vmem:[#allocation5 + $0xc] sm:$0xff]
    %v101 = vld [vmem:[#allocation5 + $0x14] sm:$0xf]
    %v102 = vld [vmem:[#allocation5 + $0x18] sm:$0xff]
    %v103 = vld [vmem:[#allocation5 + $0x20] sm:$0xf]
    %v104 = vld [vmem:[#allocation5 + $0x24] sm:$0xff]
    %v105 = vld [vmem:[#allocation5 + $0x2c] sm:$0xf]
    %v106 = vld [vmem:[#allocation5 + $0x30] sm:$0xff]
    %v107 = vld [vmem:[#allocation5 + $0x38] sm:$0xf]
    %v108 = vld [vmem:[#allocation5 + $0x3c] sm:$0xff]
    %v109 = vld [vmem:[#allocation5 + $0x44] sm:$0xf]
    %v110 = vld [vmem:[#allocation5 + $0x48] sm:$0xff]
    %v111 = vld [vmem:[#allocation5 + $0x50] sm:$0xf]
    %v112 = vld [vmem:[#allocation5 + $0x54] sm:$0xff]
    %v113 = vld [vmem:[#allocation5 + $0x5c] sm:$0xf]
    %v114 = vld [vmem:[#allocation5 + $0x60] sm:$0xff]
    %v115 = vld [vmem:[#allocation5 + $0x68] sm:$0xf]
    %v116 = vld [vmem:[#allocation5 + $0x6c] sm:$0xff]
    %v117 = vld [vmem:[#allocation5 + $0x74] sm:$0xf]
    %v118 = vld [vmem:[#allocation5 + $0x78] sm:$0xff]
    %v119 = vld [vmem:[#allocation5 + $0x80] sm:$0xf]
    %v120 = vld [vmem:[#allocation5 + $0x84] sm:$0xff]
    %v121 = vld [vmem:[#allocation5 + $0x8c] sm:$0xf]
    %v122 = vld [vmem:[#allocation5 + $0x90] sm:$0xff]
    %v123 = vld [vmem:[#allocation5 + $0x98] sm:$0xf]
    %v124 = vld [vmem:[#allocation5 + $0x9c] sm:$0xff]
    %v125 = vld [vmem:[#allocation5 + $0xa4] sm:$0xf]
    %v126 = vld [vmem:[#allocation5 + $0xa8] sm:$0xff]
    %v127 = vld [vmem:[#allocation5 + $0xb0] sm:$0xf]
    %v128 = vld [vmem:[#allocation5 + $0xb4] sm:$0xff]
    %v129 = vld [vmem:[#allocation5 + $0xbc] sm:$0xf]
    %v130 = vld [vmem:[#allocation5 + $0xc0] sm:$0xff]
    %v131 = vld [vmem:[#allocation5 + $0xc8] sm:$0xf]
    %v132 = vld [vmem:[#allocation5 + $0xcc] sm:$0xff]
    %v133 = vld [vmem:[#allocation5 + $0xd4] sm:$0xf]
    %v134 = vld [vmem:[#allocation5 + $0xd8] sm:$0xff]
    %v135 = vld [vmem:[#allocation5 + $0xe0] sm:$0xf]
    %v136 = vld [vmem:[#allocation5 + $0xe4] sm:$0xff]
    %v137 = vld [vmem:[#allocation5 + $0xec] sm:$0xf]
    %v138 = vld [vmem:[#allocation5 + $0xf0] sm:$0xff]
    %v139 = vld [vmem:[#allocation5 + $0xf8] sm:$0xf]
    %v140 = vld [vmem:[#allocation5 + $0xfc] sm:$0xff]
    %v141 = vld [vmem:[#allocation5 + $0x104] sm:$0xf]
    %v142 = vld [vmem:[#allocation5 + $0x108] sm:$0xff]
    %v143 = vld [vmem:[#allocation5 + $0x110] sm:$0xf]
    %v144 = vld [vmem:[#allocation5 + $0x114] sm:$0xff]
    %v145 = vld [vmem:[#allocation5 + $0x11c] sm:$0xf]
    %v146 = vld [vmem:[#allocation5 + $0x120] sm:$0xff]
    %v147 = vld [vmem:[#allocation5 + $0x128] sm:$0xf]
    %v148 = vld [vmem:[#allocation5 + $0x12c] sm:$0xff]
    %v149 = vld [vmem:[#allocation5 + $0x134] sm:$0xf]
    %v150 = vld [vmem:[#allocation5 + $0x138] sm:$0xff]
    %v151 = vld [vmem:[#allocation5 + $0x140] sm:$0xf]
    %v152 = vld [vmem:[#allocation5 + $0x144] sm:$0xff]
    %v153 = vld [vmem:[#allocation5 + $0x14c] sm:$0xf]
    %v154 = vld [vmem:[#allocation5 + $0x150] sm:$0xff]
    %v155 = vld [vmem:[#allocation5 + $0x158] sm:$0xf]
    %v156 = vld [vmem:[#allocation5 + $0x15c] sm:$0xff]
    %v157 = vld [vmem:[#allocation5 + $0x164] sm:$0xf]
    %v158 = vld [vmem:[#allocation5 + $0x168] sm:$0xff]
    %v159 = vld [vmem:[#allocation5 + $0x170] sm:$0xf]
    %v160 = vld [vmem:[#allocation5 + $0x174] sm:$0xff]
    %v161 = vld [vmem:[#allocation5 + $0x17c] sm:$0xf]
    %v162 = vld [vmem:[#allocation5 + $0x180] sm:$0xff]
    %v163 = vld [vmem:[#allocation5 + $0x188] sm:$0xf]
    %v164 = vld [vmem:[#allocation5 + $0x18c] sm:$0xff]
    %v165 = vld [vmem:[#allocation5 + $0x194] sm:$0xf]
    %v166 = vld [vmem:[#allocation5 + $0x198] sm:$0xff]
    %v167 = vld [vmem:[#allocation5 + $0x1a0] sm:$0xf]
    %v168 = vld [vmem:[#allocation5 + $0x1a4] sm:$0xff]
    %v169 = vld [vmem:[#allocation5 + $0x1ac] sm:$0xf]
    %v170 = vld [vmem:[#allocation5 + $0x1b0] sm:$0xff]
    %v171 = vld [vmem:[#allocation5 + $0x1b8] sm:$0xf]
    %v172 = vld [vmem:[#allocation5 + $0x1bc] sm:$0xff]
    %v173 = vld [vmem:[#allocation5 + $0x1c4] sm:$0xf]
    %v174 = vld [vmem:[#allocation5 + $0x1c8] sm:$0xff]
    %v175 = vld [vmem:[#allocation5 + $0x1d0] sm:$0xf]
    %v176 = vld [vmem:[#allocation5 + $0x1d4] sm:$0xff]
    %v177 = vld [vmem:[#allocation5 + $0x1dc] sm:$0xf]
    %v178 = vld [vmem:[#allocation5 + $0x1e0] sm:$0xff]
    %v179 = vld [vmem:[#allocation5 + $0x1e8] sm:$0xf]
    %v180 = vld [vmem:[#allocation5 + $0x1ec] sm:$0xff]
    %v181 = vld [vmem:[#allocation5 + $0x1f4] sm:$0xf]
    %v182 = vld [vmem:[#allocation5 + $0x1f8] sm:$0xff]
    %v183 = vld [vmem:[#allocation5 + $0x200] sm:$0xf]
    %v184 = vld [vmem:[#allocation5 + $0x204] sm:$0xff]
    %v185 = vld [vmem:[#allocation5 + $0x20c] sm:$0xf]
    %v186 = vld [vmem:[#allocation5 + $0x210] sm:$0xff]
    %v187 = vld [vmem:[#allocation5 + $0x218] sm:$0xf]
    %v188 = vld [vmem:[#allocation5 + $0x21c] sm:$0xff]
    %v189 = vld [vmem:[#allocation5 + $0x224] sm:$0xf]
    %v190 = vld [vmem:[#allocation5 + $0x228] sm:$0xff]
    %v191 = vld [vmem:[#allocation5 + $0x230] sm:$0xf]
    %v192 = vld [vmem:[#allocation5 + $0x234] sm:$0xff]
    %v193 = vld [vmem:[#allocation5 + $0x23c] sm:$0xf]
    %v194 = vld [vmem:[#allocation5 + $0x240] sm:$0xff]
    %v195 = vld [vmem:[#allocation5 + $0x248] sm:$0xf]
    %v196 = vld [vmem:[#allocation5 + $0x24c] sm:$0xff]
    %v197 = vld [vmem:[#allocation5 + $0x254] sm:$0xf]
    %v198 = vld [vmem:[#allocation5 + $0x258] sm:$0xff]
    %v199 = vld [vmem:[#allocation5 + $0x260] sm:$0xf]
    %v200 = vld [vmem:[#allocation5 + $0x264] sm:$0xff]
    %v201 = vld [vmem:[#allocation5 + $0x26c] sm:$0xf]
    %v202 = vld [vmem:[#allocation5 + $0x270] sm:$0xff]
    %v203 = vld [vmem:[#allocation5 + $0x278] sm:$0xf]
    %v204 = vld [vmem:[#allocation5 + $0x27c] sm:$0xff]
    %v205 = vld [vmem:[#allocation5 + $0x284] sm:$0xf]
    %v206 = vld [vmem:[#allocation5 + $0x288] sm:$0xff]
    %v207 = vld [vmem:[#allocation5 + $0x290] sm:$0xf]
    %v208 = vld [vmem:[#allocation5 + $0x294] sm:$0xff]
    %v209 = vld [vmem:[#allocation5 + $0x29c] sm:$0xf]
    %v210 = vld [vmem:[#allocation5 + $0x2a0] sm:$0xff]
    %v211 = vld [vmem:[#allocation5 + $0x2a8] sm:$0xf]
    %v212 = vld [vmem:[#allocation5 + $0x2ac] sm:$0xff]
    %v213 = vld [vmem:[#allocation5 + $0x2b4] sm:$0xf]
    %v214 = vld [vmem:[#allocation5 + $0x2b8] sm:$0xff]
    %v215 = vld [vmem:[#allocation5 + $0x2c0] sm:$0xf]
    %v216 = vld [vmem:[#allocation5 + $0x2c4] sm:$0xff]
    %v217 = vld [vmem:[#allocation5 + $0x2cc] sm:$0xf]
    %v218 = vld [vmem:[#allocation5 + $0x2d0] sm:$0xff]
    %v219 = vld [vmem:[#allocation5 + $0x2d8] sm:$0xf]
    %v220 = vld [vmem:[#allocation5 + $0x2dc] sm:$0xff]
    %v221 = vld [vmem:[#allocation5 + $0x2e4] sm:$0xf]
    %v222 = vld [vmem:[#allocation5 + $0x2e8] sm:$0xff]
    %v223 = vld [vmem:[#allocation5 + $0x2f0] sm:$0xf]
    %v224 = vld [vmem:[#allocation5 + $0x2f4] sm:$0xff]
    %v225 = vld [vmem:[#allocation5 + $0x2fc] sm:$0xf]
    %v226 = vld [vmem:[#allocation5 + $0x300] sm:$0xff]
    %v227 = vld [vmem:[#allocation5 + $0x308] sm:$0xf]
    %v228 = vld [vmem:[#allocation5 + $0x30c] sm:$0xff]
    %v229 = vld [vmem:[#allocation5 + $0x314] sm:$0xf]
    %v230 = vld [vmem:[#allocation5 + $0x318] sm:$0xff]
    %v231 = vld [vmem:[#allocation5 + $0x320] sm:$0xf]
    %v232 = vld [vmem:[#allocation5 + $0x324] sm:$0xff]
    %v233 = vld [vmem:[#allocation5 + $0x32c] sm:$0xf]
    %v234 = vld [vmem:[#allocation5 + $0x330] sm:$0xff]
    %v235 = vld [vmem:[#allocation5 + $0x338] sm:$0xf]
    %v236 = vld [vmem:[#allocation5 + $0x33c] sm:$0xff]
    %v237 = vld [vmem:[#allocation5 + $0x344] sm:$0xf]
    %v238 = vld [vmem:[#allocation5 + $0x348] sm:$0xff]
    %v239 = vld [vmem:[#allocation5 + $0x350] sm:$0xf]
    %v240 = vld [vmem:[#allocation5 + $0x354] sm:$0xff]
    %v241 = vld [vmem:[#allocation5 + $0x35c] sm:$0xf]
    %v242 = vld [vmem:[#allocation5 + $0x360] sm:$0xff]
    %v243 = vld [vmem:[#allocation5 + $0x368] sm:$0xf]
    %v244 = vld [vmem:[#allocation5 + $0x36c] sm:$0xff]
    %v245 = vld [vmem:[#allocation5 + $0x374] sm:$0xf]
    %v246 = vld [vmem:[#allocation5 + $0x378] sm:$0xff]
    %v247 = vld [vmem:[#allocation5 + $0x380] sm:$0xf]
    %v248 = vld [vmem:[#allocation5 + $0x384] sm:$0xff]
    %v249 = vld [vmem:[#allocation5 + $0x38c] sm:$0xf]
    %v250 = vld [vmem:[#allocation5 + $0x390] sm:$0xff]
    %v251 = vld [vmem:[#allocation5 + $0x398] sm:$0xf]
    %v252 = vld [vmem:[#allocation5 + $0x39c] sm:$0xff]
    %v253 = vld [vmem:[#allocation5 + $0x3a4] sm:$0xf]
    %v254 = vld [vmem:[#allocation5 + $0x3a8] sm:$0xff]
    %v255 = vld [vmem:[#allocation5 + $0x3b0] sm:$0xf]
    %v256 = vld [vmem:[#allocation5 + $0x3b4] sm:$0xff]
    %v257 = vld [vmem:[#allocation5 + $0x3bc] sm:$0xf]
    %v258 = vld [vmem:[#allocation5 + $0x3c0] sm:$0xff]
    %v259 = vld [vmem:[#allocation5 + $0x3c8] sm:$0xf]
    %v260 = vld [vmem:[#allocation5 + $0x3cc] sm:$0xff]
    %v261 = vld [vmem:[#allocation5 + $0x3d4] sm:$0xf]
    %v262 = vld [vmem:[#allocation5 + $0x3d8] sm:$0xff]
    %v263 = vld [vmem:[#allocation5 + $0x3e0] sm:$0xf]
    %v264 = vld [vmem:[#allocation5 + $0x3e4] sm:$0xff]
    %v265 = vld [vmem:[#allocation5 + $0x3ec] sm:$0xf]
    %v266 = vld [vmem:[#allocation5 + $0x3f0] sm:$0xff]
    %v267 = vld [vmem:[#allocation5 + $0x3f8] sm:$0xf]
    %v268 = vld [vmem:[#allocation5 + $0x3fc] sm:$0xff]
    %v269 = vld [vmem:[#allocation5 + $0x404] sm:$0xf]
    %v270 = vld [vmem:[#allocation5 + $0x408] sm:$0xff]
    %v271 = vld [vmem:[#allocation5 + $0x410] sm:$0xf]
    %v272 = vld [vmem:[#allocation5 + $0x414] sm:$0xff]
    %v273 = vld [vmem:[#allocation5 + $0x41c] sm:$0xf]
    %v274 = vld [vmem:[#allocation5 + $0x420] sm:$0xff]
    %v275 = vld [vmem:[#allocation5 + $0x428] sm:$0xf]
    %v276 = vld [vmem:[#allocation5 + $0x42c] sm:$0xff]
    %v277 = vld [vmem:[#allocation5 + $0x434] sm:$0xf]
    %v278 = vld [vmem:[#allocation5 + $0x438] sm:$0xff]
    %v279 = vld [vmem:[#allocation5 + $0x440] sm:$0xf]
    %v280 = vld [vmem:[#allocation5 + $0x444] sm:$0xff]
    %v281 = vld [vmem:[#allocation5 + $0x44c] sm:$0xf]
    %v282 = vld [vmem:[#allocation5 + $0x450] sm:$0xff]
    %v283 = vld [vmem:[#allocation5 + $0x458] sm:$0xf]
    %v284 = vld [vmem:[#allocation5 + $0x45c] sm:$0xff]
    %v285 = vld [vmem:[#allocation5 + $0x464] sm:$0xf]
    %v286 = vld [vmem:[#allocation5 + $0x468] sm:$0xff]
    %v287 = vld [vmem:[#allocation5 + $0x470] sm:$0xf]
    %v288 = vld [vmem:[#allocation5 + $0x474] sm:$0xff]
    %v289 = vld [vmem:[#allocation5 + $0x47c] sm:$0xf]
    %v320 = vunpack.c.l.b16 %v68
    %v321 = vunpack.c.h.b16 %v68
    %v322 = vunpack.c.l.b16 %v69
    %v323 = vunpack.c.h.b16 %v69
    %v324 = vunpack.c.l.b16 %v70
    %v325 = vunpack.c.h.b16 %v70
    %v326 = vunpack.c.l.b16 %v71
    %v327 = vunpack.c.h.b16 %v71
    %v328 = vunpack.c.l.b16 %v72
    %v329 = vunpack.c.h.b16 %v72
    %v330 = vunpack.c.l.b16 %v73
    %v331 = vunpack.c.h.b16 %v73
    %v332 = vunpack.c.l.b16 %v74
    %v333 = vunpack.c.h.b16 %v74
    %v334 = vunpack.c.l.b16 %v75
    %v335 = vunpack.c.h.b16 %v75
    %v336 = vunpack.c.l.b16 %v76
    %v337 = vunpack.c.h.b16 %v76
    %v338 = vunpack.c.l.b16 %v77
    %v339 = vunpack.c.h.b16 %v77
    %v340 = vunpack.c.l.b16 %v78
    %v341 = vunpack.c.h.b16 %v78
    %v342 = vunpack.c.l.b16 %v79
    %v343 = vunpack.c.h.b16 %v79
    %v344 = vunpack.c.l.b16 %v80
    %v345 = vunpack.c.h.b16 %v80
    %v346 = vunpack.c.l.b16 %v81
    %v347 = vunpack.c.h.b16 %v81
    %v348 = vunpack.c.l.b16 %v82
    %v349 = vunpack.c.h.b16 %v82
    %v350 = vunpack.c.l.b16 %v83
    %v351 = vunpack.c.h.b16 %v83
    %v352 = vunpack.c.l.b16 %v84
    %v353 = vunpack.c.h.b16 %v84
    %v354 = vunpack.c.l.b16 %v85
    %v355 = vunpack.c.h.b16 %v85
    %v356 = vunpack.c.l.b16 %v86
    %v357 = vunpack.c.h.b16 %v86
    %v358 = vunpack.c.l.b16 %v87
    %v359 = vunpack.c.h.b16 %v87
    %v360 = vunpack.c.l.b16 %v88
    %v361 = vunpack.c.h.b16 %v88
    %v362 = vunpack.c.l.b16 %v89
    %v363 = vunpack.c.h.b16 %v89
    %v364 = vunpack.c.l.b16 %v90
    %v365 = vunpack.c.h.b16 %v90
    %v366 = vunpack.c.l.b16 %v91
    %v367 = vunpack.c.h.b16 %v91
    %v368 = vunpack.c.l.b16 %v92
    %v369 = vunpack.c.h.b16 %v92
    %v370 = vunpack.c.l.b16 %v93
    %v371 = vunpack.c.h.b16 %v93
    %v372 = vunpack.c.l.b16 %v94
    %v373 = vunpack.c.h.b16 %v94
    %v374 = vunpack.c.l.b16 %v95
    %v375 = vunpack.c.h.b16 %v95
    %v376 = vunpack.c.l.b16 %v96
    %v377 = vunpack.c.h.b16 %v96
    %v378 = vunpack.c.l.b16 %v97
    %v379 = vunpack.c.h.b16 %v97
    %v380 = vpack.c.b16 %v326, %v320
    %v381 = vpack.c.b16 %v327, %v321
    %v382 = vpack.c.b16 %v328, %v322
    %v383 = vpack.c.b16 %v329, %v323
    %v384 = vpack.c.b16 %v330, %v324
    %v385 = vpack.c.b16 %v331, %v325
    %v386 = vpack.c.b16 %v338, %v332
    %v387 = vpack.c.b16 %v339, %v333
    %v388 = vpack.c.b16 %v340, %v334
    %v389 = vpack.c.b16 %v341, %v335
    %v390 = vpack.c.b16 %v342, %v336
    %v391 = vpack.c.b16 %v343, %v337
    %v392 = vpack.c.b16 %v350, %v344
    %v393 = vpack.c.b16 %v351, %v345
    %v394 = vpack.c.b16 %v352, %v346
    %v395 = vpack.c.b16 %v353, %v347
    %v396 = vpack.c.b16 %v354, %v348
    %v397 = vpack.c.b16 %v355, %v349
    %v398 = vpack.c.b16 %v362, %v356
    %v399 = vpack.c.b16 %v363, %v357
    %v400 = vpack.c.b16 %v364, %v358
    %v401 = vpack.c.b16 %v365, %v359
    %v402 = vpack.c.b16 %v366, %v360
    %v403 = vpack.c.b16 %v367, %v361
    %v404 = vpack.c.b16 %v374, %v368
    %v405 = vpack.c.b16 %v375, %v369
    %v406 = vpack.c.b16 %v376, %v370
    %v407 = vpack.c.b16 %v377, %v371
    %v408 = vpack.c.b16 %v378, %v372
    %v409 = vpack.c.b16 %v379, %v373
    %v632 = vunpack.c.l.b16 %v98
    %v633 = vunpack.c.h.b16 %v98
    %v634 = vunpack.c.l.b16 %v99
    %v635 = vunpack.c.l.b16 %v100
    %v636 = vunpack.c.h.b16 %v100
    %v637 = vunpack.c.l.b16 %v101
    %v638 = vunpack.c.l.b16 %v102
    %v639 = vunpack.c.h.b16 %v102
    %v640 = vunpack.c.l.b16 %v103
    %v641 = vunpack.c.l.b16 %v104
    %v642 = vunpack.c.h.b16 %v104
    %v643 = vunpack.c.l.b16 %v105
    %v644 = vunpack.c.l.b16 %v106
    %v645 = vunpack.c.h.b16 %v106
    %v646 = vunpack.c.l.b16 %v107
    %v647 = vunpack.c.l.b16 %v108
    %v648 = vunpack.c.h.b16 %v108
    %v649 = vunpack.c.l.b16 %v109
    %v650 = vunpack.c.l.b16 %v110
    %v651 = vunpack.c.h.b16 %v110
    %v652 = vunpack.c.l.b16 %v111
    %v653 = vunpack.c.l.b16 %v112
    %v654 = vunpack.c.h.b16 %v112
    %v655 = vunpack.c.l.b16 %v113
    %v656 = vunpack.c.l.b16 %v114
    %v657 = vunpack.c.h.b16 %v114
    %v658 = vunpack.c.l.b16 %v115
    %v659 = vunpack.c.l.b16 %v116
    %v660 = vunpack.c.h.b16 %v116
    %v661 = vunpack.c.l.b16 %v117
    %v662 = vunpack.c.l.b16 %v118
    %v663 = vunpack.c.h.b16 %v118
    %v664 = vunpack.c.l.b16 %v119
    %v665 = vunpack.c.l.b16 %v120
    %v666 = vunpack.c.h.b16 %v120
    %v667 = vunpack.c.l.b16 %v121
    %v668 = vunpack.c.l.b16 %v122
    %v669 = vunpack.c.h.b16 %v122
    %v670 = vunpack.c.l.b16 %v123
    %v671 = vunpack.c.l.b16 %v124
    %v672 = vunpack.c.h.b16 %v124
    %v673 = vunpack.c.l.b16 %v125
    %v674 = vunpack.c.l.b16 %v126
    %v675 = vunpack.c.h.b16 %v126
    %v676 = vunpack.c.l.b16 %v127
    %v677 = vunpack.c.l.b16 %v128
    %v678 = vunpack.c.h.b16 %v128
    %v679 = vunpack.c.l.b16 %v129
    %v680 = vunpack.c.l.b16 %v130
    %v681 = vunpack.c.h.b16 %v130
    %v682 = vunpack.c.l.b16 %v131
    %v683 = vunpack.c.l.b16 %v132
    %v684 = vunpack.c.h.b16 %v132
    %v685 = vunpack.c.l.b16 %v133
    %v686 = vunpack.c.l.b16 %v134
    %v687 = vunpack.c.h.b16 %v134
    %v688 = vunpack.c.l.b16 %v135
    %v689 = vunpack.c.l.b16 %v136
    %v690 = vunpack.c.h.b16 %v136
    %v691 = vunpack.c.l.b16 %v137
    %v692 = vunpack.c.l.b16 %v138
    %v693 = vunpack.c.h.b16 %v138
    %v694 = vunpack.c.l.b16 %v139
    %v695 = vunpack.c.l.b16 %v140
    %v696 = vunpack.c.h.b16 %v140
    %v697 = vunpack.c.l.b16 %v141
    %v698 = vunpack.c.l.b16 %v142
    %v699 = vunpack.c.h.b16 %v142
    %v700 = vunpack.c.l.b16 %v143
    %v701 = vunpack.c.l.b16 %v144
    %v702 = vunpack.c.h.b16 %v144
    %v703 = vunpack.c.l.b16 %v145
    %v704 = vunpack.c.l.b16 %v146
    %v705 = vunpack.c.h.b16 %v146
    %v706 = vunpack.c.l.b16 %v147
    %v707 = vunpack.c.l.b16 %v148
    %v708 = vunpack.c.h.b16 %v148
    %v709 = vunpack.c.l.b16 %v149
    %v710 = vunpack.c.l.b16 %v150
    %v711 = vunpack.c.h.b16 %v150
    %v712 = vunpack.c.l.b16 %v151
    %v713 = vunpack.c.l.b16 %v152
    %v714 = vunpack.c.h.b16 %v152
    %v715 = vunpack.c.l.b16 %v153
    %v716 = vunpack.c.l.b16 %v154
    %v717 = vunpack.c.h.b16 %v154
    %v718 = vunpack.c.l.b16 %v155
    %v719 = vunpack.c.l.b16 %v156
    %v720 = vunpack.c.h.b16 %v156
    %v721 = vunpack.c.l.b16 %v157
    %v722 = vunpack.c.l.b16 %v158
    %v723 = vunpack.c.h.b16 %v158
    %v724 = vunpack.c.l.b16 %v159
    %v725 = vunpack.c.l.b16 %v160
    %v726 = vunpack.c.h.b16 %v160
    %v727 = vunpack.c.l.b16 %v161
    %v728 = vunpack.c.l.b16 %v162
    %v729 = vunpack.c.h.b16 %v162
    %v730 = vunpack.c.l.b16 %v163
    %v731 = vunpack.c.l.b16 %v164
    %v732 = vunpack.c.h.b16 %v164
    %v733 = vunpack.c.l.b16 %v165
    %v734 = vunpack.c.l.b16 %v166
    %v735 = vunpack.c.h.b16 %v166
    %v736 = vunpack.c.l.b16 %v167
    %v737 = vunpack.c.l.b16 %v168
    %v738 = vunpack.c.h.b16 %v168
    %v739 = vunpack.c.l.b16 %v169
    %v740 = vunpack.c.l.b16 %v170
    %v741 = vunpack.c.h.b16 %v170
    %v742 = vunpack.c.l.b16 %v171
    %v743 = vunpack.c.l.b16 %v172
    %v744 = vunpack.c.h.b16 %v172
    %v745 = vunpack.c.l.b16 %v173
    %v746 = vunpack.c.l.b16 %v174
    %v747 = vunpack.c.h.b16 %v174
    %v748 = vunpack.c.l.b16 %v175
    %v749 = vunpack.c.l.b16 %v176
    %v750 = vunpack.c.h.b16 %v176
    %v751 = vunpack.c.l.b16 %v177
    %v752 = vunpack.c.l.b16 %v178
    %v753 = vunpack.c.h.b16 %v178
    %v754 = vunpack.c.l.b16 %v179
    %v755 = vunpack.c.l.b16 %v180
    %v756 = vunpack.c.h.b16 %v180
    %v757 = vunpack.c.l.b16 %v181
    %v758 = vunpack.c.l.b16 %v182
    %v759 = vunpack.c.h.b16 %v182
    %v760 = vunpack.c.l.b16 %v183
    %v761 = vunpack.c.l.b16 %v184
    %v762 = vunpack.c.h.b16 %v184
    %v763 = vunpack.c.l.b16 %v185
    %v764 = vunpack.c.l.b16 %v186
    %v765 = vunpack.c.h.b16 %v186
    %v766 = vunpack.c.l.b16 %v187
    %v767 = vunpack.c.l.b16 %v188
    %v768 = vunpack.c.h.b16 %v188
    %v769 = vunpack.c.l.b16 %v189
    %v770 = vunpack.c.l.b16 %v190
    %v771 = vunpack.c.h.b16 %v190
    %v772 = vunpack.c.l.b16 %v191
    %v773 = vunpack.c.l.b16 %v192
    %v774 = vunpack.c.h.b16 %v192
    %v775 = vunpack.c.l.b16 %v193
    %v776 = vunpack.c.l.b16 %v194
    %v777 = vunpack.c.h.b16 %v194
    %v778 = vunpack.c.l.b16 %v195
    %v779 = vunpack.c.l.b16 %v196
    %v780 = vunpack.c.h.b16 %v196
    %v781 = vunpack.c.l.b16 %v197
    %v782 = vunpack.c.l.b16 %v198
    %v783 = vunpack.c.h.b16 %v198
    %v784 = vunpack.c.l.b16 %v199
    %v785 = vunpack.c.l.b16 %v200
    %v786 = vunpack.c.h.b16 %v200
    %v787 = vunpack.c.l.b16 %v201
    %v788 = vunpack.c.l.b16 %v202
    %v789 = vunpack.c.h.b16 %v202
    %v790 = vunpack.c.l.b16 %v203
    %v791 = vunpack.c.l.b16 %v204
    %v792 = vunpack.c.h.b16 %v204
    %v793 = vunpack.c.l.b16 %v205
    %v794 = vunpack.c.l.b16 %v206
    %v795 = vunpack.c.h.b16 %v206
    %v796 = vunpack.c.l.b16 %v207
    %v797 = vunpack.c.l.b16 %v208
    %v798 = vunpack.c.h.b16 %v208
    %v799 = vunpack.c.l.b16 %v209
    %v800 = vunpack.c.l.b16 %v210
    %v801 = vunpack.c.h.b16 %v210
    %v802 = vunpack.c.l.b16 %v211
    %v803 = vunpack.c.l.b16 %v212
    %v804 = vunpack.c.h.b16 %v212
    %v805 = vunpack.c.l.b16 %v213
    %v806 = vunpack.c.l.b16 %v214
    %v807 = vunpack.c.h.b16 %v214
    %v808 = vunpack.c.l.b16 %v215
    %v809 = vunpack.c.l.b16 %v216
    %v810 = vunpack.c.h.b16 %v216
    %v811 = vunpack.c.l.b16 %v217
    %v812 = vunpack.c.l.b16 %v218
    %v813 = vunpack.c.h.b16 %v218
    %v814 = vunpack.c.l.b16 %v219
    %v815 = vunpack.c.l.b16 %v220
    %v816 = vunpack.c.h.b16 %v220
    %v817 = vunpack.c.l.b16 %v221
    %v818 = vunpack.c.l.b16 %v222
    %v819 = vunpack.c.h.b16 %v222
    %v820 = vunpack.c.l.b16 %v223
    %v821 = vunpack.c.l.b16 %v224
    %v822 = vunpack.c.h.b16 %v224
    %v823 = vunpack.c.l.b16 %v225
    %v824 = vunpack.c.l.b16 %v226
    %v825 = vunpack.c.h.b16 %v226
    %v826 = vunpack.c.l.b16 %v227
    %v827 = vunpack.c.l.b16 %v228
    %v828 = vunpack.c.h.b16 %v228
    %v829 = vunpack.c.l.b16 %v229
    %v830 = vunpack.c.l.b16 %v230
    %v831 = vunpack.c.h.b16 %v230
    %v832 = vunpack.c.l.b16 %v231
    %v833 = vunpack.c.l.b16 %v232
    %v834 = vunpack.c.h.b16 %v232
    %v835 = vunpack.c.l.b16 %v233
    %v836 = vunpack.c.l.b16 %v234
    %v837 = vunpack.c.h.b16 %v234
    %v838 = vunpack.c.l.b16 %v235
    %v839 = vunpack.c.l.b16 %v236
    %v840 = vunpack.c.h.b16 %v236
    %v841 = vunpack.c.l.b16 %v237
    %v842 = vunpack.c.l.b16 %v238
    %v843 = vunpack.c.h.b16 %v238
    %v844 = vunpack.c.l.b16 %v239
    %v845 = vunpack.c.l.b16 %v240
    %v846 = vunpack.c.h.b16 %v240
    %v847 = vunpack.c.l.b16 %v241
    %v848 = vunpack.c.l.b16 %v242
    %v849 = vunpack.c.h.b16 %v242
    %v850 = vunpack.c.l.b16 %v243
    %v851 = vunpack.c.l.b16 %v244
    %v852 = vunpack.c.h.b16 %v244
    %v853 = vunpack.c.l.b16 %v245
    %v854 = vunpack.c.l.b16 %v246
    %v855 = vunpack.c.h.b16 %v246
    %v856 = vunpack.c.l.b16 %v247
    %v857 = vunpack.c.l.b16 %v248
    %v858 = vunpack.c.h.b16 %v248
    %v859 = vunpack.c.l.b16 %v249
    %v860 = vunpack.c.l.b16 %v250
    %v861 = vunpack.c.h.b16 %v250
    %v862 = vunpack.c.l.b16 %v251
    %v863 = vunpack.c.l.b16 %v252
    %v864 = vunpack.c.h.b16 %v252
    %v865 = vunpack.c.l.b16 %v253
    %v866 = vunpack.c.l.b16 %v254
    %v867 = vunpack.c.h.b16 %v254
    %v868 = vunpack.c.l.b16 %v255
    %v869 = vunpack.c.l.b16 %v256
    %v870 = vunpack.c.h.b16 %v256
    %v871 = vunpack.c.l.b16 %v257
    %v872 = vunpack.c.l.b16 %v258
    %v873 = vunpack.c.h.b16 %v258
    %v874 = vunpack.c.l.b16 %v259
    %v875 = vunpack.c.l.b16 %v260
    %v876 = vunpack.c.h.b16 %v260
    %v877 = vunpack.c.l.b16 %v261
    %v878 = vunpack.c.l.b16 %v262
    %v879 = vunpack.c.h.b16 %v262
    %v880 = vunpack.c.l.b16 %v263
    %v881 = vunpack.c.l.b16 %v264
    %v882 = vunpack.c.h.b16 %v264
    %v883 = vunpack.c.l.b16 %v265
    %v884 = vunpack.c.l.b16 %v266
    %v885 = vunpack.c.h.b16 %v266
    %v886 = vunpack.c.l.b16 %v267
    %v887 = vunpack.c.l.b16 %v268
    %v888 = vunpack.c.h.b16 %v268
    %v889 = vunpack.c.l.b16 %v269
    %v890 = vunpack.c.l.b16 %v270
    %v891 = vunpack.c.h.b16 %v270
    %v892 = vunpack.c.l.b16 %v271
    %v893 = vunpack.c.l.b16 %v272
    %v894 = vunpack.c.h.b16 %v272
    %v895 = vunpack.c.l.b16 %v273
    %v896 = vunpack.c.l.b16 %v274
    %v897 = vunpack.c.h.b16 %v274
    %v898 = vunpack.c.l.b16 %v275
    %v899 = vunpack.c.l.b16 %v276
    %v900 = vunpack.c.h.b16 %v276
    %v901 = vunpack.c.l.b16 %v277
    %v902 = vunpack.c.l.b16 %v278
    %v903 = vunpack.c.h.b16 %v278
    %v904 = vunpack.c.l.b16 %v279
    %v905 = vunpack.c.l.b16 %v280
    %v906 = vunpack.c.h.b16 %v280
    %v907 = vunpack.c.l.b16 %v281
    %v908 = vunpack.c.l.b16 %v282
    %v909 = vunpack.c.h.b16 %v282
    %v910 = vunpack.c.l.b16 %v283
    %v911 = vunpack.c.l.b16 %v284
    %v912 = vunpack.c.h.b16 %v284
    %v913 = vunpack.c.l.b16 %v285
    %v914 = vunpack.c.l.b16 %v286
    %v915 = vunpack.c.h.b16 %v286
    %v916 = vunpack.c.l.b16 %v287
    %v917 = vunpack.c.l.b16 %v288
    %v918 = vunpack.c.h.b16 %v288
    %v919 = vunpack.c.l.b16 %v289
    %v920 = vpack.c.b16 %v635, %v632
    %v921 = vpack.c.b16 %v636, %v633
    %v922 = vpack.c.b16 %v637, %v634
    %v923 = vpack.c.b16 %v641, %v638
    %v924 = vpack.c.b16 %v642, %v639
    %v925 = vpack.c.b16 %v643, %v640
    %v926 = vpack.c.b16 %v647, %v644
    %v927 = vpack.c.b16 %v648, %v645
    %v928 = vpack.c.b16 %v649, %v646
    %v929 = vpack.c.b16 %v653, %v650
    %v930 = vpack.c.b16 %v654, %v651
    %v931 = vpack.c.b16 %v655, %v652
    %v932 = vpack.c.b16 %v659, %v656
    %v933 = vpack.c.b16 %v660, %v657
    %v934 = vpack.c.b16 %v661, %v658
    %v935 = vpack.c.b16 %v665, %v662
    %v936 = vpack.c.b16 %v666, %v663
    %v937 = vpack.c.b16 %v667, %v664
    %v938 = vpack.c.b16 %v671, %v668
    %v939 = vpack.c.b16 %v672, %v669
    %v940 = vpack.c.b16 %v673, %v670
    %v941 = vpack.c.b16 %v677, %v674
    %v942 = vpack.c.b16 %v678, %v675
    %v943 = vpack.c.b16 %v679, %v676
    %v944 = vpack.c.b16 %v683, %v680
    %v945 = vpack.c.b16 %v684, %v681
    %v946 = vpack.c.b16 %v685, %v682
    %v947 = vpack.c.b16 %v689, %v686
    %v948 = vpack.c.b16 %v690, %v687
    %v949 = vpack.c.b16 %v691, %v688
    %v950 = vpack.c.b16 %v695, %v692
    %v951 = vpack.c.b16 %v696, %v693
    %v952 = vpack.c.b16 %v697, %v694
    %v953 = vpack.c.b16 %v701, %v698
    %v954 = vpack.c.b16 %v702, %v699
    %v955 = vpack.c.b16 %v703, %v700
    %v956 = vpack.c.b16 %v707, %v704
    %v957 = vpack.c.b16 %v708, %v705
    %v958 = vpack.c.b16 %v709, %v706
    %v959 = vpack.c.b16 %v713, %v710
    %v960 = vpack.c.b16 %v714, %v711
    %v961 = vpack.c.b16 %v715, %v712
    %v962 = vpack.c.b16 %v719, %v716
    %v963 = vpack.c.b16 %v720, %v717
    %v964 = vpack.c.b16 %v721, %v718
    %v965 = vpack.c.b16 %v725, %v722
    %v966 = vpack.c.b16 %v726, %v723
    %v967 = vpack.c.b16 %v727, %v724
    %v968 = vpack.c.b16 %v731, %v728
    %v969 = vpack.c.b16 %v732, %v729
    %v970 = vpack.c.b16 %v733, %v730
    %v971 = vpack.c.b16 %v737, %v734
    %v972 = vpack.c.b16 %v738, %v735
    %v973 = vpack.c.b16 %v739, %v736
    %v974 = vpack.c.b16 %v743, %v740
    %v975 = vpack.c.b16 %v744, %v741
    %v976 = vpack.c.b16 %v745, %v742
    %v977 = vpack.c.b16 %v749, %v746
    %v978 = vpack.c.b16 %v750, %v747
    %v979 = vpack.c.b16 %v751, %v748
    %v980 = vpack.c.b16 %v755, %v752
    %v981 = vpack.c.b16 %v756, %v753
    %v982 = vpack.c.b16 %v757, %v754
    %v983 = vpack.c.b16 %v761, %v758
    %v984 = vpack.c.b16 %v762, %v759
    %v985 = vpack.c.b16 %v763, %v760
    %v986 = vpack.c.b16 %v767, %v764
    %v987 = vpack.c.b16 %v768, %v765
    %v988 = vpack.c.b16 %v769, %v766
    %v989 = vpack.c.b16 %v773, %v770
    %v990 = vpack.c.b16 %v774, %v771
    %v991 = vpack.c.b16 %v775, %v772
    %v992 = vpack.c.b16 %v779, %v776
    %v993 = vpack.c.b16 %v780, %v777
    %v994 = vpack.c.b16 %v781, %v778
    %v995 = vpack.c.b16 %v785, %v782
    %v996 = vpack.c.b16 %v786, %v783
    %v997 = vpack.c.b16 %v787, %v784
    %v998 = vpack.c.b16 %v791, %v788
    %v999 = vpack.c.b16 %v792, %v789
    %v1000 = vpack.c.b16 %v793, %v790
    %v1001 = vpack.c.b16 %v797, %v794
    %v1002 = vpack.c.b16 %v798, %v795
    %v1003 = vpack.c.b16 %v799, %v796
    %v1004 = vpack.c.b16 %v803, %v800
    %v1005 = vpack.c.b16 %v804, %v801
    %v1006 = vpack.c.b16 %v805, %v802
    %v1007 = vpack.c.b16 %v809, %v806
    %v1008 = vpack.c.b16 %v810, %v807
    %v1009 = vpack.c.b16 %v811, %v808
    %v1010 = vpack.c.b16 %v815, %v812
    %v1011 = vpack.c.b16 %v816, %v813
    %v1012 = vpack.c.b16 %v817, %v814
    %v1013 = vpack.c.b16 %v821, %v818
    %v1014 = vpack.c.b16 %v822, %v819
    %v1015 = vpack.c.b16 %v823, %v820
    %v1016 = vpack.c.b16 %v827, %v824
    %v1017 = vpack.c.b16 %v828, %v825
    %v1018 = vpack.c.b16 %v829, %v826
    %v1019 = vpack.c.b16 %v833, %v830
    %v1020 = vpack.c.b16 %v834, %v831
    %v1021 = vpack.c.b16 %v835, %v832
    %v1022 = vpack.c.b16 %v839, %v836
    %v1023 = vpack.c.b16 %v840, %v837
    %v1024 = vpack.c.b16 %v841, %v838
    %v1025 = vpack.c.b16 %v845, %v842
    %v1026 = vpack.c.b16 %v846, %v843
    %v1027 = vpack.c.b16 %v847, %v844
    %v1028 = vpack.c.b16 %v851, %v848
    %v1029 = vpack.c.b16 %v852, %v849
    %v1030 = vpack.c.b16 %v853, %v850
    %v1031 = vpack.c.b16 %v857, %v854
    %v1032 = vpack.c.b16 %v858, %v855
    %v1033 = vpack.c.b16 %v859, %v856
    %v1034 = vpack.c.b16 %v863, %v860
    %v1035 = vpack.c.b16 %v864, %v861
    %v1036 = vpack.c.b16 %v865, %v862
    %v1037 = vpack.c.b16 %v869, %v866
    %v1038 = vpack.c.b16 %v870, %v867
    %v1039 = vpack.c.b16 %v871, %v868
    %v1040 = vpack.c.b16 %v875, %v872
    %v1041 = vpack.c.b16 %v876, %v873
    %v1042 = vpack.c.b16 %v877, %v874
    %v1043 = vpack.c.b16 %v881, %v878
    %v1044 = vpack.c.b16 %v882, %v879
    %v1045 = vpack.c.b16 %v883, %v880
    %v1046 = vpack.c.b16 %v887, %v884
    %v1047 = vpack.c.b16 %v888, %v885
    %v1048 = vpack.c.b16 %v889, %v886
    %v1049 = vpack.c.b16 %v893, %v890
    %v1050 = vpack.c.b16 %v894, %v891
    %v1051 = vpack.c.b16 %v895, %v892
    %v1052 = vpack.c.b16 %v899, %v896
    %v1053 = vpack.c.b16 %v900, %v897
    %v1054 = vpack.c.b16 %v901, %v898
    %v1055 = vpack.c.b16 %v905, %v902
    %v1056 = vpack.c.b16 %v906, %v903
    %v1057 = vpack.c.b16 %v907, %v904
    %v1058 = vpack.c.b16 %v911, %v908
    %v1059 = vpack.c.b16 %v912, %v909
    %v1060 = vpack.c.b16 %v913, %v910
    %v1061 = vpack.c.b16 %v917, %v914
    %v1062 = vpack.c.b16 %v918, %v915
    %v1063 = vpack.c.b16 %v919, %v916
    %1208 = vmatpush.bf16.msra.mxu0 %v941
    %1209 = vmatpush.bf16.msra.mxu0 %v938
    %1210 = vmatpush.bf16.msra.mxu0 %v935
    %1211 = vmatpush.bf16.msra.mxu0 %v932
    %1212 = vmatpush.bf16.msra.mxu0 %v929
    %1213 = vmatpush.bf16.msra.mxu0 %v926
    %1214 = vmatpush.bf16.msra.mxu0 %v923
    %1215 = vmatpush.bf16.msra.mxu0 %v920
    %1216 = vmatmul.bf16.gmra.mxu0 %v380
    %v1217 = vpop.f32.mrf.mxu0
    %v1218 = vadd.f32 0.0, %v1217
    %v1219 = vpop.f32.mrf.mxu0
    %v1220 = vadd.f32 0.0, %v1219
    %1221 = vmatmul.bf16.gmra.mxu0 %v386
    %v1222 = vpop.f32.mrf.mxu0
    %v1223 = vadd.f32 0.0, %v1222
    %v1224 = vpop.f32.mrf.mxu0
    %v1225 = vadd.f32 0.0, %v1224
    %1226 = vmatmul.bf16.gmra.mxu0 %v392
    %v1227 = vpop.f32.mrf.mxu0
    %v1228 = vadd.f32 0.0, %v1227
    %v1229 = vpop.f32.mrf.mxu0
    %v1230 = vadd.f32 0.0, %v1229
    %1231 = vmatmul.bf16.gmra.mxu0 %v398
    %v1232 = vpop.f32.mrf.mxu0
    %v1233 = vadd.f32 0.0, %v1232
    %v1234 = vpop.f32.mrf.mxu0
    %v1235 = vadd.f32 0.0, %v1234
    %1236 = vmatmul.bf16.gmra.mxu0 %v404
    %v1237 = vpop.f32.mrf.mxu0
    %v1238 = vpop.f32.mrf.mxu0
    %1239 = vdwg.mxu0
    %1240 = vmatpush.bf16.msra.mxu0 %v965
    %1241 = vmatpush.bf16.msra.mxu0 %v962
    %1242 = vmatpush.bf16.msra.mxu0 %v959
    %1243 = vmatpush.bf16.msra.mxu0 %v956
    %1244 = vmatpush.bf16.msra.mxu0 %v953
    %1245 = vmatpush.bf16.msra.mxu0 %v950
    %1246 = vmatpush.bf16.msra.mxu0 %v947
    %1247 = vmatpush.bf16.msra.mxu0 %v944
    %1248 = vmatmul.bf16.gmra.mxu0 %v381
    %v1249 = vpop.f32.mrf.mxu0
    %v1250 = vadd.f32 %v1218, %v1249
    %v1251 = vpop.f32.mrf.mxu0
    %v1252 = vadd.f32 %v1220, %v1251
    %1253 = vmatmul.bf16.gmra.mxu0 %v387
    %v1254 = vpop.f32.mrf.mxu0
    %v1255 = vadd.f32 %v1223, %v1254
    %v1256 = vpop.f32.mrf.mxu0
    %v1257 = vadd.f32 %v1225, %v1256
    %1258 = vmatmul.bf16.gmra.mxu0 %v393
    %v1259 = vpop.f32.mrf.mxu0
    %v1260 = vadd.f32 %v1228, %v1259
    %v1261 = vpop.f32.mrf.mxu0
    %v1262 = vadd.f32 %v1230, %v1261
    %1263 = vmatmul.bf16.gmra.mxu0 %v399
    %v1264 = vpop.f32.mrf.mxu0
    %v1265 = vadd.f32 %v1233, %v1264
    %v1266 = vpop.f32.mrf.mxu0
    %v1267 = vadd.f32 %v1235, %v1266
    %1268 = vmatmul.bf16.gmra.mxu0 %v405
    %v1269 = vpop.f32.mrf.mxu0
    %v1270 = vpop.f32.mrf.mxu0
    %1271 = vdwg.mxu0
    %1272 = vmatpush.bf16.msra.mxu0 %v989
    %1273 = vmatpush.bf16.msra.mxu0 %v986
    %1274 = vmatpush.bf16.msra.mxu0 %v983
    %1275 = vmatpush.bf16.msra.mxu0 %v980
    %1276 = vmatpush.bf16.msra.mxu0 %v977
    %1277 = vmatpush.bf16.msra.mxu0 %v974
    %1278 = vmatpush.bf16.msra.mxu0 %v971
    %1279 = vmatpush.bf16.msra.mxu0 %v968
    %1280 = vmatmul.bf16.gmra.mxu0 %v382
    %v1281 = vpop.f32.mrf.mxu0
    %v1282 = vadd.f32 %v1250, %v1281
    %v1283 = vpop.f32.mrf.mxu0
    %v1284 = vadd.f32 %v1252, %v1283
    %1285 = vmatmul.bf16.gmra.mxu0 %v388
    %v1286 = vpop.f32.mrf.mxu0
    %v1287 = vadd.f32 %v1255, %v1286
    %v1288 = vpop.f32.mrf.mxu0
    %v1289 = vadd.f32 %v1257, %v1288
    %1290 = vmatmul.bf16.gmra.mxu0 %v394
    %v1291 = vpop.f32.mrf.mxu0
    %v1292 = vadd.f32 %v1260, %v1291
    %v1293 = vpop.f32.mrf.mxu0
    %v1294 = vadd.f32 %v1262, %v1293
    %1295 = vmatmul.bf16.gmra.mxu0 %v400
    %v1296 = vpop.f32.mrf.mxu0
    %v1297 = vadd.f32 %v1265, %v1296
    %v1298 = vpop.f32.mrf.mxu0
    %v1299 = vadd.f32 %v1267, %v1298
    %1300 = vmatmul.bf16.gmra.mxu0 %v406
    %v1301 = vpop.f32.mrf.mxu0
    %v1302 = vpop.f32.mrf.mxu0
    %1303 = vdwg.mxu0
    %1304 = vmatpush.bf16.msra.mxu0 %v1013
    %1305 = vmatpush.bf16.msra.mxu0 %v1010
    %1306 = vmatpush.bf16.msra.mxu0 %v1007
    %1307 = vmatpush.bf16.msra.mxu0 %v1004
    %1308 = vmatpush.bf16.msra.mxu0 %v1001
    %1309 = vmatpush.bf16.msra.mxu0 %v998
    %1310 = vmatpush.bf16.msra.mxu0 %v995
    %1311 = vmatpush.bf16.msra.mxu0 %v992
    %1312 = vmatmul.bf16.gmra.mxu0 %v383
    %v1313 = vpop.f32.mrf.mxu0
    %v1314 = vadd.f32 %v1282, %v1313
    %v1315 = vpop.f32.mrf.mxu0
    %v1316 = vadd.f32 %v1284, %v1315
    %1317 = vmatmul.bf16.gmra.mxu0 %v389
    %v1318 = vpop.f32.mrf.mxu0
    %v1319 = vadd.f32 %v1287, %v1318
    %v1320 = vpop.f32.mrf.mxu0
    %v1321 = vadd.f32 %v1289, %v1320
    %1322 = vmatmul.bf16.gmra.mxu0 %v395
    %v1323 = vpop.f32.mrf.mxu0
    %v1324 = vadd.f32 %v1292, %v1323
    %v1325 = vpop.f32.mrf.mxu0
    %v1326 = vadd.f32 %v1294, %v1325
    %1327 = vmatmul.bf16.gmra.mxu0 %v401
    %v1328 = vpop.f32.mrf.mxu0
    %v1329 = vadd.f32 %v1297, %v1328
    %v1330 = vpop.f32.mrf.mxu0
    %v1331 = vadd.f32 %v1299, %v1330
    %1332 = vmatmul.bf16.gmra.mxu0 %v407
    %v1333 = vpop.f32.mrf.mxu0
    %v1334 = vpop.f32.mrf.mxu0
    %1335 = vdwg.mxu0
    %1336 = vmatpush.bf16.msra.mxu0 %v1037
    %1337 = vmatpush.bf16.msra.mxu0 %v1034
    %1338 = vmatpush.bf16.msra.mxu0 %v1031
    %1339 = vmatpush.bf16.msra.mxu0 %v1028
    %1340 = vmatpush.bf16.msra.mxu0 %v1025
    %1341 = vmatpush.bf16.msra.mxu0 %v1022
    %1342 = vmatpush.bf16.msra.mxu0 %v1019
    %1343 = vmatpush.bf16.msra.mxu0 %v1016
    %1344 = vmatmul.bf16.gmra.mxu0 %v384
    %v1345 = vpop.f32.mrf.mxu0
    %v1346 = vadd.f32 %v1314, %v1345
    %v1347 = vpop.f32.mrf.mxu0
    %v1348 = vadd.f32 %v1316, %v1347
    %1349 = vmatmul.bf16.gmra.mxu0 %v390
    %v1350 = vpop.f32.mrf.mxu0
    %v1351 = vadd.f32 %v1319, %v1350
    %v1352 = vpop.f32.mrf.mxu0
    %v1353 = vadd.f32 %v1321, %v1352
    %1354 = vmatmul.bf16.gmra.mxu0 %v396
    %v1355 = vpop.f32.mrf.mxu0
    %v1356 = vadd.f32 %v1324, %v1355
    %v1357 = vpop.f32.mrf.mxu0
    %v1358 = vadd.f32 %v1326, %v1357
    %1359 = vmatmul.bf16.gmra.mxu0 %v402
    %v1360 = vpop.f32.mrf.mxu0
    %v1361 = vadd.f32 %v1329, %v1360
    %v1362 = vpop.f32.mrf.mxu0
    %v1363 = vadd.f32 %v1331, %v1362
    %1364 = vmatmul.bf16.gmra.mxu0 %v408
    %v1365 = vpop.f32.mrf.mxu0
    %v1366 = vpop.f32.mrf.mxu0
    %1367 = vdwg.mxu0
    %1368 = vmatpush.bf16.msra.mxu0 %v1061
    %1369 = vmatpush.bf16.msra.mxu0 %v1058
    %1370 = vmatpush.bf16.msra.mxu0 %v1055
    %1371 = vmatpush.bf16.msra.mxu0 %v1052
    %1372 = vmatpush.bf16.msra.mxu0 %v1049
    %1373 = vmatpush.bf16.msra.mxu0 %v1046
    %1374 = vmatpush.bf16.msra.mxu0 %v1043
    %1375 = vmatpush.bf16.msra.mxu0 %v1040
    %1376 = vmatmul.bf16.gmra.mxu0 %v385
    %v1377 = vpop.f32.mrf.mxu0
    %v1378 = vadd.f32 %v1346, %v1377
    %v1379 = vpop.f32.mrf.mxu0
    %v1380 = vadd.f32 %v1348, %v1379
    %1381 = vmatmul.bf16.gmra.mxu0 %v391
    %v1382 = vpop.f32.mrf.mxu0
    %v1383 = vadd.f32 %v1351, %v1382
    %v1384 = vpop.f32.mrf.mxu0
    %v1385 = vadd.f32 %v1353, %v1384
    %1386 = vmatmul.bf16.gmra.mxu0 %v397
    %v1387 = vpop.f32.mrf.mxu0
    %v1388 = vadd.f32 %v1356, %v1387
    %v1389 = vpop.f32.mrf.mxu0
    %v1390 = vadd.f32 %v1358, %v1389
    %1391 = vmatmul.bf16.gmra.mxu0 %v403
    %v1392 = vpop.f32.mrf.mxu0
    %v1393 = vadd.f32 %v1361, %v1392
    %v1394 = vpop.f32.mrf.mxu0
    %v1395 = vadd.f32 %v1363, %v1394
    %1396 = vmatmul.bf16.gmra.mxu0 %v409
    %v1397 = vpop.f32.mrf.mxu0
    %v1398 = vpop.f32.mrf.mxu0
    %1399 = vdwg.mxu0
    %1400 = vmatpush.bf16.msra.mxu0 %v942
    %1401 = vmatpush.bf16.msra.mxu0 %v939
    %1402 = vmatpush.bf16.msra.mxu0 %v936
    %1403 = vmatpush.bf16.msra.mxu0 %v933
    %1404 = vmatpush.bf16.msra.mxu0 %v930
    %1405 = vmatpush.bf16.msra.mxu0 %v927
    %1406 = vmatpush.bf16.msra.mxu0 %v924
    %1407 = vmatpush.bf16.msra.mxu0 %v921
    %1408 = vmatmul.bf16.gmra.mxu0 %v380
    %v1409 = vpop.f32.mrf.mxu0
    %v1410 = vpop.f32.mrf.mxu0
    %v1411 = vadd.f32 0.0, %v1410
    %1412 = vmatmul.bf16.gmra.mxu0 %v386
    %v1413 = vpop.f32.mrf.mxu0
    %v1414 = vadd.f32 0.0, %v1413
    %v1415 = vpop.f32.mrf.mxu0
    %v1416 = vadd.f32 0.0, %v1415
    %1417 = vmatmul.bf16.gmra.mxu0 %v392
    %v1418 = vpop.f32.mrf.mxu0
    %v1419 = vadd.f32 0.0, %v1418
    %v1420 = vpop.f32.mrf.mxu0
    %v1421 = vadd.f32 0.0, %v1420
    %1422 = vmatmul.bf16.gmra.mxu0 %v398
    %v1423 = vpop.f32.mrf.mxu0
    %v1424 = vadd.f32 0.0, %v1423
    %v1425 = vpop.f32.mrf.mxu0
    %v1426 = vadd.f32 0.0, %v1425
    %1427 = vmatmul.bf16.gmra.mxu0 %v404
    %v1428 = vpop.f32.mrf.mxu0
    %v1429 = vadd.f32 0.0, %v1428
    %v1430 = vpop.f32.mrf.mxu0
    %1431 = vdwg.mxu0
    %1432 = vmatpush.bf16.msra.mxu0 %v966
    %1433 = vmatpush.bf16.msra.mxu0 %v963
    %1434 = vmatpush.bf16.msra.mxu0 %v960
    %1435 = vmatpush.bf16.msra.mxu0 %v957
    %1436 = vmatpush.bf16.msra.mxu0 %v954
    %1437 = vmatpush.bf16.msra.mxu0 %v951
    %1438 = vmatpush.bf16.msra.mxu0 %v948
    %1439 = vmatpush.bf16.msra.mxu0 %v945
    %1440 = vmatmul.bf16.gmra.mxu0 %v381
    %v1441 = vpop.f32.mrf.mxu0
    %v1442 = vpop.f32.mrf.mxu0
    %v1443 = vadd.f32 %v1411, %v1442
    %1444 = vmatmul.bf16.gmra.mxu0 %v387
    %v1445 = vpop.f32.mrf.mxu0
    %v1446 = vadd.f32 %v1414, %v1445
    %v1447 = vpop.f32.mrf.mxu0
    %v1448 = vadd.f32 %v1416, %v1447
    %1449 = vmatmul.bf16.gmra.mxu0 %v393
    %v1450 = vpop.f32.mrf.mxu0
    %v1451 = vadd.f32 %v1419, %v1450
    %v1452 = vpop.f32.mrf.mxu0
    %v1453 = vadd.f32 %v1421, %v1452
    %1454 = vmatmul.bf16.gmra.mxu0 %v399
    %v1455 = vpop.f32.mrf.mxu0
    %v1456 = vadd.f32 %v1424, %v1455
    %v1457 = vpop.f32.mrf.mxu0
    %v1458 = vadd.f32 %v1426, %v1457
    %1459 = vmatmul.bf16.gmra.mxu0 %v405
    %v1460 = vpop.f32.mrf.mxu0
    %v1461 = vadd.f32 %v1429, %v1460
    %v1462 = vpop.f32.mrf.mxu0
    %1463 = vdwg.mxu0
    %1464 = vmatpush.bf16.msra.mxu0 %v990
    %1465 = vmatpush.bf16.msra.mxu0 %v987
    %1466 = vmatpush.bf16.msra.mxu0 %v984
    %1467 = vmatpush.bf16.msra.mxu0 %v981
    %1468 = vmatpush.bf16.msra.mxu0 %v978
    %1469 = vmatpush.bf16.msra.mxu0 %v975
    %1470 = vmatpush.bf16.msra.mxu0 %v972
    %1471 = vmatpush.bf16.msra.mxu0 %v969
    %1472 = vmatmul.bf16.gmra.mxu0 %v382
    %v1473 = vpop.f32.mrf.mxu0
    %v1474 = vpop.f32.mrf.mxu0
    %v1475 = vadd.f32 %v1443, %v1474
    %1476 = vmatmul.bf16.gmra.mxu0 %v388
    %v1477 = vpop.f32.mrf.mxu0
    %v1478 = vadd.f32 %v1446, %v1477
    %v1479 = vpop.f32.mrf.mxu0
    %v1480 = vadd.f32 %v1448, %v1479
    %1481 = vmatmul.bf16.gmra.mxu0 %v394
    %v1482 = vpop.f32.mrf.mxu0
    %v1483 = vadd.f32 %v1451, %v1482
    %v1484 = vpop.f32.mrf.mxu0
    %v1485 = vadd.f32 %v1453, %v1484
    %1486 = vmatmul.bf16.gmra.mxu0 %v400
    %v1487 = vpop.f32.mrf.mxu0
    %v1488 = vadd.f32 %v1456, %v1487
    %v1489 = vpop.f32.mrf.mxu0
    %v1490 = vadd.f32 %v1458, %v1489
    %1491 = vmatmul.bf16.gmra.mxu0 %v406
    %v1492 = vpop.f32.mrf.mxu0
    %v1493 = vadd.f32 %v1461, %v1492
    %v1494 = vpop.f32.mrf.mxu0
    %1495 = vdwg.mxu0
    %1496 = vmatpush.bf16.msra.mxu0 %v1014
    %1497 = vmatpush.bf16.msra.mxu0 %v1011
    %1498 = vmatpush.bf16.msra.mxu0 %v1008
    %1499 = vmatpush.bf16.msra.mxu0 %v1005
    %1500 = vmatpush.bf16.msra.mxu0 %v1002
    %1501 = vmatpush.bf16.msra.mxu0 %v999
    %1502 = vmatpush.bf16.msra.mxu0 %v996
    %1503 = vmatpush.bf16.msra.mxu0 %v993
    %1504 = vmatmul.bf16.gmra.mxu0 %v383
    %v1505 = vpop.f32.mrf.mxu0
    %v1506 = vpop.f32.mrf.mxu0
    %v1507 = vadd.f32 %v1475, %v1506
    %1508 = vmatmul.bf16.gmra.mxu0 %v389
    %v1509 = vpop.f32.mrf.mxu0
    %v1510 = vadd.f32 %v1478, %v1509
    %v1511 = vpop.f32.mrf.mxu0
    %v1512 = vadd.f32 %v1480, %v1511
    %1513 = vmatmul.bf16.gmra.mxu0 %v395
    %v1514 = vpop.f32.mrf.mxu0
    %v1515 = vadd.f32 %v1483, %v1514
    %v1516 = vpop.f32.mrf.mxu0
    %v1517 = vadd.f32 %v1485, %v1516
    %1518 = vmatmul.bf16.gmra.mxu0 %v401
    %v1519 = vpop.f32.mrf.mxu0
    %v1520 = vadd.f32 %v1488, %v1519
    %v1521 = vpop.f32.mrf.mxu0
    %v1522 = vadd.f32 %v1490, %v1521
    %1523 = vmatmul.bf16.gmra.mxu0 %v407
    %v1524 = vpop.f32.mrf.mxu0
    %v1525 = vadd.f32 %v1493, %v1524
    %v1526 = vpop.f32.mrf.mxu0
    %1527 = vdwg.mxu0
    %1528 = vmatpush.bf16.msra.mxu0 %v1038
    %1529 = vmatpush.bf16.msra.mxu0 %v1035
    %1530 = vmatpush.bf16.msra.mxu0 %v1032
    %1531 = vmatpush.bf16.msra.mxu0 %v1029
    %1532 = vmatpush.bf16.msra.mxu0 %v1026
    %1533 = vmatpush.bf16.msra.mxu0 %v1023
    %1534 = vmatpush.bf16.msra.mxu0 %v1020
    %1535 = vmatpush.bf16.msra.mxu0 %v1017
    %1536 = vmatmul.bf16.gmra.mxu0 %v384
    %v1537 = vpop.f32.mrf.mxu0
    %v1538 = vpop.f32.mrf.mxu0
    %v1539 = vadd.f32 %v1507, %v1538
    %1540 = vmatmul.bf16.gmra.mxu0 %v390
    %v1541 = vpop.f32.mrf.mxu0
    %v1542 = vadd.f32 %v1510, %v1541
    %v1543 = vpop.f32.mrf.mxu0
    %v1544 = vadd.f32 %v1512, %v1543
    %1545 = vmatmul.bf16.gmra.mxu0 %v396
    %v1546 = vpop.f32.mrf.mxu0
    %v1547 = vadd.f32 %v1515, %v1546
    %v1548 = vpop.f32.mrf.mxu0
    %v1549 = vadd.f32 %v1517, %v1548
    %1550 = vmatmul.bf16.gmra.mxu0 %v402
    %v1551 = vpop.f32.mrf.mxu0
    %v1552 = vadd.f32 %v1520, %v1551
    %v1553 = vpop.f32.mrf.mxu0
    %v1554 = vadd.f32 %v1522, %v1553
    %1555 = vmatmul.bf16.gmra.mxu0 %v408
    %v1556 = vpop.f32.mrf.mxu0
    %v1557 = vadd.f32 %v1525, %v1556
    %v1558 = vpop.f32.mrf.mxu0
    %1559 = vdwg.mxu0
    %1560 = vmatpush.bf16.msra.mxu0 %v1062
    %1561 = vmatpush.bf16.msra.mxu0 %v1059
    %1562 = vmatpush.bf16.msra.mxu0 %v1056
    %1563 = vmatpush.bf16.msra.mxu0 %v1053
    %1564 = vmatpush.bf16.msra.mxu0 %v1050
    %1565 = vmatpush.bf16.msra.mxu0 %v1047
    %1566 = vmatpush.bf16.msra.mxu0 %v1044
    %1567 = vmatpush.bf16.msra.mxu0 %v1041
    %1568 = vmatmul.bf16.gmra.mxu0 %v385
    %v1569 = vpop.f32.mrf.mxu0
    %v1570 = vpop.f32.mrf.mxu0
    %v1571 = vadd.f32 %v1539, %v1570
    %1572 = vmatmul.bf16.gmra.mxu0 %v391
    %v1573 = vpop.f32.mrf.mxu0
    %v1574 = vadd.f32 %v1542, %v1573
    %v1575 = vpop.f32.mrf.mxu0
    %v1576 = vadd.f32 %v1544, %v1575
    %1577 = vmatmul.bf16.gmra.mxu0 %v397
    %v1578 = vpop.f32.mrf.mxu0
    %v1579 = vadd.f32 %v1547, %v1578
    %v1580 = vpop.f32.mrf.mxu0
    %v1581 = vadd.f32 %v1549, %v1580
    %1582 = vmatmul.bf16.gmra.mxu0 %v403
    %v1583 = vpop.f32.mrf.mxu0
    %v1584 = vadd.f32 %v1552, %v1583
    %v1585 = vpop.f32.mrf.mxu0
    %v1586 = vadd.f32 %v1554, %v1585
    %1587 = vmatmul.bf16.gmra.mxu0 %v409
    %v1588 = vpop.f32.mrf.mxu0
    %v1589 = vadd.f32 %v1557, %v1588
    %v1590 = vpop.f32.mrf.mxu0
    %1591 = vdwg.mxu0
    %1592 = vmatpush.bf16.msra.mxu0 %v943
    %1593 = vmatpush.bf16.msra.mxu0 %v940
    %1594 = vmatpush.bf16.msra.mxu0 %v937
    %1595 = vmatpush.bf16.msra.mxu0 %v934
    %1596 = vmatpush.bf16.msra.mxu0 %v931
    %1597 = vmatpush.bf16.msra.mxu0 %v928
    %1598 = vmatpush.bf16.msra.mxu0 %v925
    %1599 = vmatpush.bf16.msra.mxu0 %v922
    %1600 = vmatmul.bf16.gmra.mxu0 %v380
    %v1601 = vpop.f32.mrf.mxu0
    %v1602 = vpop.f32.mrf.mxu0
    %1603 = vmatmul.bf16.gmra.mxu0 %v386
    %v1604 = vpop.f32.mrf.mxu0
    %v1605 = vadd.f32 0.0, %v1604
    %v1606 = vpop.f32.mrf.mxu0
    %v1607 = vadd.f32 0.0, %v1606
    %1608 = vmatmul.bf16.gmra.mxu0 %v392
    %v1609 = vpop.f32.mrf.mxu0
    %v1610 = vadd.f32 0.0, %v1609
    %v1611 = vpop.f32.mrf.mxu0
    %v1612 = vadd.f32 0.0, %v1611
    %1613 = vmatmul.bf16.gmra.mxu0 %v398
    %v1614 = vpop.f32.mrf.mxu0
    %v1615 = vadd.f32 0.0, %v1614
    %v1616 = vpop.f32.mrf.mxu0
    %v1617 = vadd.f32 0.0, %v1616
    %1618 = vmatmul.bf16.gmra.mxu0 %v404
    %v1619 = vpop.f32.mrf.mxu0
    %v1620 = vadd.f32 0.0, %v1619
    %v1621 = vpop.f32.mrf.mxu0
    %v1622 = vadd.f32 0.0, %v1621
    %1623 = vdwg.mxu0
    %1624 = vmatpush.bf16.msra.mxu0 %v967
    %1625 = vmatpush.bf16.msra.mxu0 %v964
    %1626 = vmatpush.bf16.msra.mxu0 %v961
    %1627 = vmatpush.bf16.msra.mxu0 %v958
    %1628 = vmatpush.bf16.msra.mxu0 %v955
    %1629 = vmatpush.bf16.msra.mxu0 %v952
    %1630 = vmatpush.bf16.msra.mxu0 %v949
    %1631 = vmatpush.bf16.msra.mxu0 %v946
    %1632 = vmatmul.bf16.gmra.mxu0 %v381
    %v1633 = vpop.f32.mrf.mxu0
    %v1634 = vpop.f32.mrf.mxu0
    %1635 = vmatmul.bf16.gmra.mxu0 %v387
    %v1636 = vpop.f32.mrf.mxu0
    %v1637 = vadd.f32 %v1605, %v1636
    %v1638 = vpop.f32.mrf.mxu0
    %v1639 = vadd.f32 %v1607, %v1638
    %1640 = vmatmul.bf16.gmra.mxu0 %v393
    %v1641 = vpop.f32.mrf.mxu0
    %v1642 = vadd.f32 %v1610, %v1641
    %v1643 = vpop.f32.mrf.mxu0
    %v1644 = vadd.f32 %v1612, %v1643
    %1645 = vmatmul.bf16.gmra.mxu0 %v399
    %v1646 = vpop.f32.mrf.mxu0
    %v1647 = vadd.f32 %v1615, %v1646
    %v1648 = vpop.f32.mrf.mxu0
    %v1649 = vadd.f32 %v1617, %v1648
    %1650 = vmatmul.bf16.gmra.mxu0 %v405
    %v1651 = vpop.f32.mrf.mxu0
    %v1652 = vadd.f32 %v1620, %v1651
    %v1653 = vpop.f32.mrf.mxu0
    %v1654 = vadd.f32 %v1622, %v1653
    %1655 = vdwg.mxu0
    %1656 = vmatpush.bf16.msra.mxu0 %v991
    %1657 = vmatpush.bf16.msra.mxu0 %v988
    %1658 = vmatpush.bf16.msra.mxu0 %v985
    %1659 = vmatpush.bf16.msra.mxu0 %v982
    %1660 = vmatpush.bf16.msra.mxu0 %v979
    %1661 = vmatpush.bf16.msra.mxu0 %v976
    %1662 = vmatpush.bf16.msra.mxu0 %v973
    %1663 = vmatpush.bf16.msra.mxu0 %v970
    %1664 = vmatmul.bf16.gmra.mxu0 %v382
    %v1665 = vpop.f32.mrf.mxu0
    %v1666 = vpop.f32.mrf.mxu0
    %1667 = vmatmul.bf16.gmra.mxu0 %v388
    %v1668 = vpop.f32.mrf.mxu0
    %v1669 = vadd.f32 %v1637, %v1668
    %v1670 = vpop.f32.mrf.mxu0
    %v1671 = vadd.f32 %v1639, %v1670
    %1672 = vmatmul.bf16.gmra.mxu0 %v394
    %v1673 = vpop.f32.mrf.mxu0
    %v1674 = vadd.f32 %v1642, %v1673
    %v1675 = vpop.f32.mrf.mxu0
    %v1676 = vadd.f32 %v1644, %v1675
    %1677 = vmatmul.bf16.gmra.mxu0 %v400
    %v1678 = vpop.f32.mrf.mxu0
    %v1679 = vadd.f32 %v1647, %v1678
    %v1680 = vpop.f32.mrf.mxu0
    %v1681 = vadd.f32 %v1649, %v1680
    %1682 = vmatmul.bf16.gmra.mxu0 %v406
    %v1683 = vpop.f32.mrf.mxu0
    %v1684 = vadd.f32 %v1652, %v1683
    %v1685 = vpop.f32.mrf.mxu0
    %v1686 = vadd.f32 %v1654, %v1685
    %1687 = vdwg.mxu0
    %1688 = vmatpush.bf16.msra.mxu0 %v1015
    %1689 = vmatpush.bf16.msra.mxu0 %v1012
    %1690 = vmatpush.bf16.msra.mxu0 %v1009
    %1691 = vmatpush.bf16.msra.mxu0 %v1006
    %1692 = vmatpush.bf16.msra.mxu0 %v1003
    %1693 = vmatpush.bf16.msra.mxu0 %v1000
    %1694 = vmatpush.bf16.msra.mxu0 %v997
    %1695 = vmatpush.bf16.msra.mxu0 %v994
    %1696 = vmatmul.bf16.gmra.mxu0 %v383
    %v1697 = vpop.f32.mrf.mxu0
    %v1698 = vpop.f32.mrf.mxu0
    %1699 = vmatmul.bf16.gmra.mxu0 %v389
    %v1700 = vpop.f32.mrf.mxu0
    %v1701 = vadd.f32 %v1669, %v1700
    %v1702 = vpop.f32.mrf.mxu0
    %v1703 = vadd.f32 %v1671, %v1702
    %1704 = vmatmul.bf16.gmra.mxu0 %v395
    %v1705 = vpop.f32.mrf.mxu0
    %v1706 = vadd.f32 %v1674, %v1705
    %v1707 = vpop.f32.mrf.mxu0
    %v1708 = vadd.f32 %v1676, %v1707
    %1709 = vmatmul.bf16.gmra.mxu0 %v401
    %v1710 = vpop.f32.mrf.mxu0
    %v1711 = vadd.f32 %v1679, %v1710
    %v1712 = vpop.f32.mrf.mxu0
    %v1713 = vadd.f32 %v1681, %v1712
    %1714 = vmatmul.bf16.gmra.mxu0 %v407
    %v1715 = vpop.f32.mrf.mxu0
    %v1716 = vadd.f32 %v1684, %v1715
    %v1717 = vpop.f32.mrf.mxu0
    %v1718 = vadd.f32 %v1686, %v1717
    %1719 = vdwg.mxu0
    %1720 = vmatpush.bf16.msra.mxu0 %v1039
    %1721 = vmatpush.bf16.msra.mxu0 %v1036
    %1722 = vmatpush.bf16.msra.mxu0 %v1033
    %1723 = vmatpush.bf16.msra.mxu0 %v1030
    %1724 = vmatpush.bf16.msra.mxu0 %v1027
    %1725 = vmatpush.bf16.msra.mxu0 %v1024
    %1726 = vmatpush.bf16.msra.mxu0 %v1021
    %1727 = vmatpush.bf16.msra.mxu0 %v1018
    %1728 = vmatmul.bf16.gmra.mxu0 %v384
    %v1729 = vpop.f32.mrf.mxu0
    %v1730 = vpop.f32.mrf.mxu0
    %1731 = vmatmul.bf16.gmra.mxu0 %v390
    %v1732 = vpop.f32.mrf.mxu0
    %v1733 = vadd.f32 %v1701, %v1732
    %v1734 = vpop.f32.mrf.mxu0
    %v1735 = vadd.f32 %v1703, %v1734
    %1736 = vmatmul.bf16.gmra.mxu0 %v396
    %v1737 = vpop.f32.mrf.mxu0
    %v1738 = vadd.f32 %v1706, %v1737
    %v1739 = vpop.f32.mrf.mxu0
    %v1740 = vadd.f32 %v1708, %v1739
    %1741 = vmatmul.bf16.gmra.mxu0 %v402
    %v1742 = vpop.f32.mrf.mxu0
    %v1743 = vadd.f32 %v1711, %v1742
    %v1744 = vpop.f32.mrf.mxu0
    %v1745 = vadd.f32 %v1713, %v1744
    %1746 = vmatmul.bf16.gmra.mxu0 %v408
    %v1747 = vpop.f32.mrf.mxu0
    %v1748 = vadd.f32 %v1716, %v1747
    %v1749 = vpop.f32.mrf.mxu0
    %v1750 = vadd.f32 %v1718, %v1749
    %1751 = vdwg.mxu0
    %1752 = vmatpush.bf16.msra.mxu0 %v1063
    %1753 = vmatpush.bf16.msra.mxu0 %v1060
    %1754 = vmatpush.bf16.msra.mxu0 %v1057
    %1755 = vmatpush.bf16.msra.mxu0 %v1054
    %1756 = vmatpush.bf16.msra.mxu0 %v1051
    %1757 = vmatpush.bf16.msra.mxu0 %v1048
    %1758 = vmatpush.bf16.msra.mxu0 %v1045
    %1759 = vmatpush.bf16.msra.mxu0 %v1042
    %1760 = vmatmul.bf16.gmra.mxu0 %v385
    %v1761 = vpop.f32.mrf.mxu0
    %v1762 = vpop.f32.mrf.mxu0
    %1763 = vmatmul.bf16.gmra.mxu0 %v391
    %v1764 = vpop.f32.mrf.mxu0
    %v1765 = vadd.f32 %v1733, %v1764
    %v1766 = vpop.f32.mrf.mxu0
    %v1767 = vadd.f32 %v1735, %v1766
    %1768 = vmatmul.bf16.gmra.mxu0 %v397
    %v1769 = vpop.f32.mrf.mxu0
    %v1770 = vadd.f32 %v1738, %v1769
    %v1771 = vpop.f32.mrf.mxu0
    %v1772 = vadd.f32 %v1740, %v1771
    %1773 = vmatmul.bf16.gmra.mxu0 %v403
    %v1774 = vpop.f32.mrf.mxu0
    %v1775 = vadd.f32 %v1743, %v1774
    %v1776 = vpop.f32.mrf.mxu0
    %v1777 = vadd.f32 %v1745, %v1776
    %1778 = vmatmul.bf16.gmra.mxu0 %v409
    %v1779 = vpop.f32.mrf.mxu0
    %v1780 = vadd.f32 %v1748, %v1779
    %v1781 = vpop.f32.mrf.mxu0
    %v1782 = vadd.f32 %v1750, %v1781
    %1783 = vdwg.mxu0
    %v1784 = vadd.f32 %v1378, %v1571
    %v1785 = vadd.f32 %v1380, %v1574
    %v1786 = vadd.f32 %v1383, %v1576
    %v1787 = vadd.f32 %v1385, %v1579
    %v1788 = vadd.f32 %v1388, %v1581
    %v1789 = vadd.f32 %v1390, %v1584
    %v1790 = vadd.f32 %v1393, %v1586
    %v1791 = vadd.f32 %v1395, %v1589
    %v1792 = vadd.f32 %v1784, %v1765
    %v1793 = vadd.f32 %v1785, %v1767
    %v1794 = vadd.f32 %v1786, %v1770
    %v1795 = vadd.f32 %v1787, %v1772
    %v1796 = vadd.f32 %v1788, %v1775
    %v1797 = vadd.f32 %v1789, %v1777
    %v1798 = vadd.f32 %v1790, %v1780
    %v1799 = vadd.f32 %v1791, %v1782
    %v1800 = vld [vmem:[%s2] sm:$0x1]
    %v1802 = vperm.slane %v1800, 0
    %v1804 = vadd.f32 %v1792, %v1802
    %v1805 = vadd.f32 %v1793, %v1802
    %v1806 = vadd.f32 %v1794, %v1802
    %v1807 = vadd.f32 %v1795, %v1802
    %v1808 = vadd.f32 %v1796, %v1802
    %v1809 = vadd.f32 %v1797, %v1802
    %v1810 = vadd.f32 %v1798, %v1802
    %v1811 = vadd.f32 %v1799, %v1802
    %v1812 = vmax.f32 %v1804, 0.0
    %v1813 = vmax.f32 %v1805, 0.0
    %v1814 = vmax.f32 %v1806, 0.0
    %v1815 = vmax.f32 %v1807, 0.0
    %v1816 = vmax.f32 %v1808, 0.0
    %v1817 = vmax.f32 %v1809, 0.0
    %v1818 = vmax.f32 %v1810, 0.0
    %v1819 = vmax.f32 %v1811, 0.0
    %v1820 = vpack.c.bf16 %v1812, %v1812
    %v1821 = vpack.c.bf16 %v1813, %v1813
    %v1822 = vpack.c.bf16 %v1814, %v1814
    %v1823 = vpack.c.bf16 %v1815, %v1815
    %v1824 = vpack.c.bf16 %v1816, %v1816
    %v1825 = vpack.c.bf16 %v1817, %v1817
    %v1826 = vpack.c.bf16 %v1818, %v1818
    %v1827 = vpack.c.bf16 %v1819, %v1819
    %v1828 = vld [vmem:[#allocation7] sm:$0xf]
    %v1829 = vld [vmem:[#allocation7 + $0x4] sm:$0xf]
    %v1830 = vld [vmem:[#allocation7 + $0x8] sm:$0xf]
    %v1831 = vld [vmem:[#allocation7 + $0xc] sm:$0xf]
    %v1832 = vld [vmem:[#allocation7 + $0x10] sm:$0xf]
    %v1833 = vld [vmem:[#allocation7 + $0x14] sm:$0xf]
    %v1834 = vld [vmem:[#allocation7 + $0x18] sm:$0xf]
    %v1835 = vld [vmem:[#allocation7 + $0x1c] sm:$0xf]
    %v1836 = vld [vmem:[#allocation7 + $0x20] sm:$0xf]
    %v1837 = vld [vmem:[#allocation7 + $0x24] sm:$0xf]
    %v1838 = vld [vmem:[#allocation7 + $0x28] sm:$0xf]
    %v1839 = vld [vmem:[#allocation7 + $0x2c] sm:$0xf]
    %v1840 = vld [vmem:[#allocation7 + $0x30] sm:$0xf]
    %v1841 = vld [vmem:[#allocation7 + $0x34] sm:$0xf]
    %v1842 = vld [vmem:[#allocation7 + $0x38] sm:$0xf]
    %v1843 = vld [vmem:[#allocation7 + $0x3c] sm:$0xf]
    %s1844 = scalar_lea.vmem [#allocation7], 64
    %v1845 = vld [vmem:[%s1844] sm:$0xf]
    %v1846 = vld [vmem:[%s1844 + $0x4] sm:$0xf]
    %v1847 = vld [vmem:[%s1844 + $0x8] sm:$0xf]
    %v1848 = vld [vmem:[%s1844 + $0xc] sm:$0xf]
    %v1849 = vld [vmem:[%s1844 + $0x10] sm:$0xf]
    %v1850 = vld [vmem:[%s1844 + $0x14] sm:$0xf]
    %v1851 = vld [vmem:[%s1844 + $0x18] sm:$0xf]
    %v1852 = vld [vmem:[%s1844 + $0x1c] sm:$0xf]
    %v1853 = vld [vmem:[%s1844 + $0x20] sm:$0xf]
    %v1854 = vld [vmem:[%s1844 + $0x24] sm:$0xf]
    %v1855 = vld [vmem:[%s1844 + $0x28] sm:$0xf]
    %v1856 = vld [vmem:[%s1844 + $0x2c] sm:$0xf]
    %v1857 = vld [vmem:[%s1844 + $0x30] sm:$0xf]
    %v1858 = vld [vmem:[%s1844 + $0x34] sm:$0xf]
    %v1859 = vld [vmem:[%s1844 + $0x38] sm:$0xf]
    %v1860 = vld [vmem:[%s1844 + $0x3c] sm:$0xf]
    %v1877 = vunpack.c.l.b16 %v1845
    %v1878 = vunpack.c.l.b16 %v1846
    %v1879 = vunpack.c.l.b16 %v1847
    %v1880 = vunpack.c.l.b16 %v1848
    %v1881 = vunpack.c.l.b16 %v1849
    %v1882 = vunpack.c.l.b16 %v1850
    %v1883 = vunpack.c.l.b16 %v1851
    %v1884 = vunpack.c.l.b16 %v1852
    %v1885 = vunpack.c.l.b16 %v1853
    %v1886 = vunpack.c.l.b16 %v1854
    %v1887 = vunpack.c.l.b16 %v1855
    %v1888 = vunpack.c.l.b16 %v1856
    %v1889 = vunpack.c.l.b16 %v1857
    %v1890 = vunpack.c.l.b16 %v1858
    %v1891 = vunpack.c.l.b16 %v1859
    %v1892 = vunpack.c.l.b16 %v1860
    %v1893 = vpack.c.b16 %v1878, %v1877
    %v1894 = vpack.c.b16 %v1880, %v1879
    %v1895 = vpack.c.b16 %v1882, %v1881
    %v1896 = vpack.c.b16 %v1884, %v1883
    %v1897 = vpack.c.b16 %v1886, %v1885
    %v1898 = vpack.c.b16 %v1888, %v1887
    %v1899 = vpack.c.b16 %v1890, %v1889
    %v1900 = vpack.c.b16 %v1892, %v1891
    %1909 = vmatpush.bf16.msra.mxu0 %v1900
    %1910 = vmatpush.bf16.msra.mxu0 %v1899
    %1911 = vmatpush.bf16.msra.mxu0 %v1898
    %1912 = vmatpush.bf16.msra.mxu0 %v1897
    %1913 = vmatpush.bf16.msra.mxu0 %v1896
    %1914 = vmatpush.bf16.msra.mxu0 %v1895
    %1915 = vmatpush.bf16.msra.mxu0 %v1894
    %1916 = vmatpush.bf16.msra.mxu0 %v1893
    %1917 = vmatmul.bf16.gmra.mxu0 %v1821
    %v1918 = vpop.f32.mrf.mxu0
    %v1919 = vadd.f32 0.0, %v1918
    %v1920 = vpop.f32.mrf.mxu0
    %1921 = vdwg.mxu0
    %v1938 = vunpack.c.l.b16 %v1828
    %v1939 = vunpack.c.l.b16 %v1829
    %v1940 = vunpack.c.l.b16 %v1830
    %v1941 = vunpack.c.l.b16 %v1831
    %v1942 = vunpack.c.l.b16 %v1832
    %v1943 = vunpack.c.l.b16 %v1833
    %v1944 = vunpack.c.l.b16 %v1834
    %v1945 = vunpack.c.l.b16 %v1835
    %v1946 = vunpack.c.l.b16 %v1836
    %v1947 = vunpack.c.l.b16 %v1837
    %v1948 = vunpack.c.l.b16 %v1838
    %v1949 = vunpack.c.l.b16 %v1839
    %v1950 = vunpack.c.l.b16 %v1840
    %v1951 = vunpack.c.l.b16 %v1841
    %v1952 = vunpack.c.l.b16 %v1842
    %v1953 = vunpack.c.l.b16 %v1843
    %v1954 = vpack.c.b16 %v1939, %v1938
    %v1955 = vpack.c.b16 %v1941, %v1940
    %v1956 = vpack.c.b16 %v1943, %v1942
    %v1957 = vpack.c.b16 %v1945, %v1944
    %v1958 = vpack.c.b16 %v1947, %v1946
    %v1959 = vpack.c.b16 %v1949, %v1948
    %v1960 = vpack.c.b16 %v1951, %v1950
    %v1961 = vpack.c.b16 %v1953, %v1952
    %1970 = vmatpush.bf16.msra.mxu0 %v1961
    %1971 = vmatpush.bf16.msra.mxu0 %v1960
    %1972 = vmatpush.bf16.msra.mxu0 %v1959
    %1973 = vmatpush.bf16.msra.mxu0 %v1958
    %1974 = vmatpush.bf16.msra.mxu0 %v1957
    %1975 = vmatpush.bf16.msra.mxu0 %v1956
    %1976 = vmatpush.bf16.msra.mxu0 %v1955
    %1977 = vmatpush.bf16.msra.mxu0 %v1954
    %1978 = vmatmul.bf16.gmra.mxu0 %v1820
    %v1979 = vpop.f32.mrf.mxu0
    %v1980 = vadd.f32 %v1919, %v1979
    %v1981 = vpop.f32.mrf.mxu0
    %1982 = vdwg.mxu0
    %s1983 = scalar_lea.vmem [#allocation7], 128
    %v1984 = vld [vmem:[%s1983] sm:$0xf]
    %v1985 = vld [vmem:[%s1983 + $0x4] sm:$0xf]
    %v1986 = vld [vmem:[%s1983 + $0x8] sm:$0xf]
    %v1987 = vld [vmem:[%s1983 + $0xc] sm:$0xf]
    %v1988 = vld [vmem:[%s1983 + $0x10] sm:$0xf]
    %v1989 = vld [vmem:[%s1983 + $0x14] sm:$0xf]
    %v1990 = vld [vmem:[%s1983 + $0x18] sm:$0xf]
    %v1991 = vld [vmem:[%s1983 + $0x1c] sm:$0xf]
    %v1992 = vld [vmem:[%s1983 + $0x20] sm:$0xf]
    %v1993 = vld [vmem:[%s1983 + $0x24] sm:$0xf]
    %v1994 = vld [vmem:[%s1983 + $0x28] sm:$0xf]
    %v1995 = vld [vmem:[%s1983 + $0x2c] sm:$0xf]
    %v1996 = vld [vmem:[%s1983 + $0x30] sm:$0xf]
    %v1997 = vld [vmem:[%s1983 + $0x34] sm:$0xf]
    %v1998 = vld [vmem:[%s1983 + $0x38] sm:$0xf]
    %v1999 = vld [vmem:[%s1983 + $0x3c] sm:$0xf]
    %v2016 = vunpack.c.l.b16 %v1984
    %v2017 = vunpack.c.l.b16 %v1985
    %v2018 = vunpack.c.l.b16 %v1986
    %v2019 = vunpack.c.l.b16 %v1987
    %v2020 = vunpack.c.l.b16 %v1988
    %v2021 = vunpack.c.l.b16 %v1989
    %v2022 = vunpack.c.l.b16 %v1990
    %v2023 = vunpack.c.l.b16 %v1991
    %v2024 = vunpack.c.l.b16 %v1992
    %v2025 = vunpack.c.l.b16 %v1993
    %v2026 = vunpack.c.l.b16 %v1994
    %v2027 = vunpack.c.l.b16 %v1995
    %v2028 = vunpack.c.l.b16 %v1996
    %v2029 = vunpack.c.l.b16 %v1997
    %v2030 = vunpack.c.l.b16 %v1998
    %v2031 = vunpack.c.l.b16 %v1999
    %v2032 = vpack.c.b16 %v2017, %v2016
    %v2033 = vpack.c.b16 %v2019, %v2018
    %v2034 = vpack.c.b16 %v2021, %v2020
    %v2035 = vpack.c.b16 %v2023, %v2022
    %v2036 = vpack.c.b16 %v2025, %v2024
    %v2037 = vpack.c.b16 %v2027, %v2026
    %v2038 = vpack.c.b16 %v2029, %v2028
    %v2039 = vpack.c.b16 %v2031, %v2030
    %2048 = vmatpush.bf16.msra.mxu0 %v2039
    %2049 = vmatpush.bf16.msra.mxu0 %v2038
    %2050 = vmatpush.bf16.msra.mxu0 %v2037
    %2051 = vmatpush.bf16.msra.mxu0 %v2036
    %2052 = vmatpush.bf16.msra.mxu0 %v2035
    %2053 = vmatpush.bf16.msra.mxu0 %v2034
    %2054 = vmatpush.bf16.msra.mxu0 %v2033
    %2055 = vmatpush.bf16.msra.mxu0 %v2032
    %2056 = vmatmul.bf16.gmra.mxu0 %v1822
    %v2057 = vpop.f32.mrf.mxu0
    %v2058 = vadd.f32 0.0, %v2057
    %v2059 = vpop.f32.mrf.mxu0
    %2060 = vdwg.mxu0
    %v2061 = vadd.f32 %v1980, %v2058
    %s2062 = scalar_lea.vmem [#allocation7], 192
    %v2063 = vld [vmem:[%s2062] sm:$0xf]
    %v2064 = vld [vmem:[%s2062 + $0x4] sm:$0xf]
    %v2065 = vld [vmem:[%s2062 + $0x8] sm:$0xf]
    %v2066 = vld [vmem:[%s2062 + $0xc] sm:$0xf]
    %v2067 = vld [vmem:[%s2062 + $0x10] sm:$0xf]
    %v2068 = vld [vmem:[%s2062 + $0x14] sm:$0xf]
    %v2069 = vld [vmem:[%s2062 + $0x18] sm:$0xf]
    %v2070 = vld [vmem:[%s2062 + $0x1c] sm:$0xf]
    %v2071 = vld [vmem:[%s2062 + $0x20] sm:$0xf]
    %v2072 = vld [vmem:[%s2062 + $0x24] sm:$0xf]
    %v2073 = vld [vmem:[%s2062 + $0x28] sm:$0xf]
    %v2074 = vld [vmem:[%s2062 + $0x2c] sm:$0xf]
    %v2075 = vld [vmem:[%s2062 + $0x30] sm:$0xf]
    %v2076 = vld [vmem:[%s2062 + $0x34] sm:$0xf]
    %v2077 = vld [vmem:[%s2062 + $0x38] sm:$0xf]
    %v2078 = vld [vmem:[%s2062 + $0x3c] sm:$0xf]
    %v2095 = vunpack.c.l.b16 %v2063
    %v2096 = vunpack.c.l.b16 %v2064
    %v2097 = vunpack.c.l.b16 %v2065
    %v2098 = vunpack.c.l.b16 %v2066
    %v2099 = vunpack.c.l.b16 %v2067
    %v2100 = vunpack.c.l.b16 %v2068
    %v2101 = vunpack.c.l.b16 %v2069
    %v2102 = vunpack.c.l.b16 %v2070
    %v2103 = vunpack.c.l.b16 %v2071
    %v2104 = vunpack.c.l.b16 %v2072
    %v2105 = vunpack.c.l.b16 %v2073
    %v2106 = vunpack.c.l.b16 %v2074
    %v2107 = vunpack.c.l.b16 %v2075
    %v2108 = vunpack.c.l.b16 %v2076
    %v2109 = vunpack.c.l.b16 %v2077
    %v2110 = vunpack.c.l.b16 %v2078
    %v2111 = vpack.c.b16 %v2096, %v2095
    %v2112 = vpack.c.b16 %v2098, %v2097
    %v2113 = vpack.c.b16 %v2100, %v2099
    %v2114 = vpack.c.b16 %v2102, %v2101
    %v2115 = vpack.c.b16 %v2104, %v2103
    %v2116 = vpack.c.b16 %v2106, %v2105
    %v2117 = vpack.c.b16 %v2108, %v2107
    %v2118 = vpack.c.b16 %v2110, %v2109
    %2127 = vmatpush.bf16.msra.mxu0 %v2118
    %2128 = vmatpush.bf16.msra.mxu0 %v2117
    %2129 = vmatpush.bf16.msra.mxu0 %v2116
    %2130 = vmatpush.bf16.msra.mxu0 %v2115
    %2131 = vmatpush.bf16.msra.mxu0 %v2114
    %2132 = vmatpush.bf16.msra.mxu0 %v2113
    %2133 = vmatpush.bf16.msra.mxu0 %v2112
    %2134 = vmatpush.bf16.msra.mxu0 %v2111
    %2135 = vmatmul.bf16.gmra.mxu0 %v1823
    %v2136 = vpop.f32.mrf.mxu0
    %v2137 = vadd.f32 0.0, %v2136
    %v2138 = vpop.f32.mrf.mxu0
    %2139 = vdwg.mxu0
    %v2140 = vadd.f32 %v2061, %v2137
    %s2141 = scalar_lea.vmem [#allocation7], 256
    %v2142 = vld [vmem:[%s2141] sm:$0xf]
    %v2143 = vld [vmem:[%s2141 + $0x4] sm:$0xf]
    %v2144 = vld [vmem:[%s2141 + $0x8] sm:$0xf]
    %v2145 = vld [vmem:[%s2141 + $0xc] sm:$0xf]
    %v2146 = vld [vmem:[%s2141 + $0x10] sm:$0xf]
    %v2147 = vld [vmem:[%s2141 + $0x14] sm:$0xf]
    %v2148 = vld [vmem:[%s2141 + $0x18] sm:$0xf]
    %v2149 = vld [vmem:[%s2141 + $0x1c] sm:$0xf]
    %v2150 = vld [vmem:[%s2141 + $0x20] sm:$0xf]
    %v2151 = vld [vmem:[%s2141 + $0x24] sm:$0xf]
    %v2152 = vld [vmem:[%s2141 + $0x28] sm:$0xf]
    %v2153 = vld [vmem:[%s2141 + $0x2c] sm:$0xf]
    %v2154 = vld [vmem:[%s2141 + $0x30] sm:$0xf]
    %v2155 = vld [vmem:[%s2141 + $0x34] sm:$0xf]
    %v2156 = vld [vmem:[%s2141 + $0x38] sm:$0xf]
    %v2157 = vld [vmem:[%s2141 + $0x3c] sm:$0xf]
    %v2174 = vunpack.c.l.b16 %v2142
    %v2175 = vunpack.c.l.b16 %v2143
    %v2176 = vunpack.c.l.b16 %v2144
    %v2177 = vunpack.c.l.b16 %v2145
    %v2178 = vunpack.c.l.b16 %v2146
    %v2179 = vunpack.c.l.b16 %v2147
    %v2180 = vunpack.c.l.b16 %v2148
    %v2181 = vunpack.c.l.b16 %v2149
    %v2182 = vunpack.c.l.b16 %v2150
    %v2183 = vunpack.c.l.b16 %v2151
    %v2184 = vunpack.c.l.b16 %v2152
    %v2185 = vunpack.c.l.b16 %v2153
    %v2186 = vunpack.c.l.b16 %v2154
    %v2187 = vunpack.c.l.b16 %v2155
    %v2188 = vunpack.c.l.b16 %v2156
    %v2189 = vunpack.c.l.b16 %v2157
    %v2190 = vpack.c.b16 %v2175, %v2174
    %v2191 = vpack.c.b16 %v2177, %v2176
    %v2192 = vpack.c.b16 %v2179, %v2178
    %v2193 = vpack.c.b16 %v2181, %v2180
    %v2194 = vpack.c.b16 %v2183, %v2182
    %v2195 = vpack.c.b16 %v2185, %v2184
    %v2196 = vpack.c.b16 %v2187, %v2186
    %v2197 = vpack.c.b16 %v2189, %v2188
    %2206 = vmatpush.bf16.msra.mxu0 %v2197
    %2207 = vmatpush.bf16.msra.mxu0 %v2196
    %2208 = vmatpush.bf16.msra.mxu0 %v2195
    %2209 = vmatpush.bf16.msra.mxu0 %v2194
    %2210 = vmatpush.bf16.msra.mxu0 %v2193
    %2211 = vmatpush.bf16.msra.mxu0 %v2192
    %2212 = vmatpush.bf16.msra.mxu0 %v2191
    %2213 = vmatpush.bf16.msra.mxu0 %v2190
    %2214 = vmatmul.bf16.gmra.mxu0 %v1824
    %v2215 = vpop.f32.mrf.mxu0
    %v2216 = vadd.f32 0.0, %v2215
    %v2217 = vpop.f32.mrf.mxu0
    %2218 = vdwg.mxu0
    %v2219 = vadd.f32 %v2140, %v2216
    %s2220 = scalar_lea.vmem [#allocation7], 320
    %v2221 = vld [vmem:[%s2220] sm:$0xf]
    %v2222 = vld [vmem:[%s2220 + $0x4] sm:$0xf]
    %v2223 = vld [vmem:[%s2220 + $0x8] sm:$0xf]
    %v2224 = vld [vmem:[%s2220 + $0xc] sm:$0xf]
    %v2225 = vld [vmem:[%s2220 + $0x10] sm:$0xf]
    %v2226 = vld [vmem:[%s2220 + $0x14] sm:$0xf]
    %v2227 = vld [vmem:[%s2220 + $0x18] sm:$0xf]
    %v2228 = vld [vmem:[%s2220 + $0x1c] sm:$0xf]
    %v2229 = vld [vmem:[%s2220 + $0x20] sm:$0xf]
    %v2230 = vld [vmem:[%s2220 + $0x24] sm:$0xf]
    %v2231 = vld [vmem:[%s2220 + $0x28] sm:$0xf]
    %v2232 = vld [vmem:[%s2220 + $0x2c] sm:$0xf]
    %v2233 = vld [vmem:[%s2220 + $0x30] sm:$0xf]
    %v2234 = vld [vmem:[%s2220 + $0x34] sm:$0xf]
    %v2235 = vld [vmem:[%s2220 + $0x38] sm:$0xf]
    %v2236 = vld [vmem:[%s2220 + $0x3c] sm:$0xf]
    %v2253 = vunpack.c.l.b16 %v2221
    %v2254 = vunpack.c.l.b16 %v2222
    %v2255 = vunpack.c.l.b16 %v2223
    %v2256 = vunpack.c.l.b16 %v2224
    %v2257 = vunpack.c.l.b16 %v2225
    %v2258 = vunpack.c.l.b16 %v2226
    %v2259 = vunpack.c.l.b16 %v2227
    %v2260 = vunpack.c.l.b16 %v2228
    %v2261 = vunpack.c.l.b16 %v2229
    %v2262 = vunpack.c.l.b16 %v2230
    %v2263 = vunpack.c.l.b16 %v2231
    %v2264 = vunpack.c.l.b16 %v2232
    %v2265 = vunpack.c.l.b16 %v2233
    %v2266 = vunpack.c.l.b16 %v2234
    %v2267 = vunpack.c.l.b16 %v2235
    %v2268 = vunpack.c.l.b16 %v2236
    %v2269 = vpack.c.b16 %v2254, %v2253
    %v2270 = vpack.c.b16 %v2256, %v2255
    %v2271 = vpack.c.b16 %v2258, %v2257
    %v2272 = vpack.c.b16 %v2260, %v2259
    %v2273 = vpack.c.b16 %v2262, %v2261
    %v2274 = vpack.c.b16 %v2264, %v2263
    %v2275 = vpack.c.b16 %v2266, %v2265
    %v2276 = vpack.c.b16 %v2268, %v2267
    %2285 = vmatpush.bf16.msra.mxu0 %v2276
    %2286 = vmatpush.bf16.msra.mxu0 %v2275
    %2287 = vmatpush.bf16.msra.mxu0 %v2274
    %2288 = vmatpush.bf16.msra.mxu0 %v2273
    %2289 = vmatpush.bf16.msra.mxu0 %v2272
    %2290 = vmatpush.bf16.msra.mxu0 %v2271
    %2291 = vmatpush.bf16.msra.mxu0 %v2270
    %2292 = vmatpush.bf16.msra.mxu0 %v2269
    %2293 = vmatmul.bf16.gmra.mxu0 %v1825
    %v2294 = vpop.f32.mrf.mxu0
    %v2295 = vadd.f32 0.0, %v2294
    %v2296 = vpop.f32.mrf.mxu0
    %2297 = vdwg.mxu0
    %v2298 = vadd.f32 %v2219, %v2295
    %s2299 = scalar_lea.vmem [#allocation7], 384
    %v2300 = vld [vmem:[%s2299] sm:$0xf]
    %v2301 = vld [vmem:[%s2299 + $0x4] sm:$0xf]
    %v2302 = vld [vmem:[%s2299 + $0x8] sm:$0xf]
    %v2303 = vld [vmem:[%s2299 + $0xc] sm:$0xf]
    %v2304 = vld [vmem:[%s2299 + $0x10] sm:$0xf]
    %v2305 = vld [vmem:[%s2299 + $0x14] sm:$0xf]
    %v2306 = vld [vmem:[%s2299 + $0x18] sm:$0xf]
    %v2307 = vld [vmem:[%s2299 + $0x1c] sm:$0xf]
    %v2308 = vld [vmem:[%s2299 + $0x20] sm:$0xf]
    %v2309 = vld [vmem:[%s2299 + $0x24] sm:$0xf]
    %v2310 = vld [vmem:[%s2299 + $0x28] sm:$0xf]
    %v2311 = vld [vmem:[%s2299 + $0x2c] sm:$0xf]
    %v2312 = vld [vmem:[%s2299 + $0x30] sm:$0xf]
    %v2313 = vld [vmem:[%s2299 + $0x34] sm:$0xf]
    %v2314 = vld [vmem:[%s2299 + $0x38] sm:$0xf]
    %v2315 = vld [vmem:[%s2299 + $0x3c] sm:$0xf]
    %v2332 = vunpack.c.l.b16 %v2300
    %v2333 = vunpack.c.l.b16 %v2301
    %v2334 = vunpack.c.l.b16 %v2302
    %v2335 = vunpack.c.l.b16 %v2303
    %v2336 = vunpack.c.l.b16 %v2304
    %v2337 = vunpack.c.l.b16 %v2305
    %v2338 = vunpack.c.l.b16 %v2306
    %v2339 = vunpack.c.l.b16 %v2307
    %v2340 = vunpack.c.l.b16 %v2308
    %v2341 = vunpack.c.l.b16 %v2309
    %v2342 = vunpack.c.l.b16 %v2310
    %v2343 = vunpack.c.l.b16 %v2311
    %v2344 = vunpack.c.l.b16 %v2312
    %v2345 = vunpack.c.l.b16 %v2313
    %v2346 = vunpack.c.l.b16 %v2314
    %v2347 = vunpack.c.l.b16 %v2315
    %v2348 = vpack.c.b16 %v2333, %v2332
    %v2349 = vpack.c.b16 %v2335, %v2334
    %v2350 = vpack.c.b16 %v2337, %v2336
    %v2351 = vpack.c.b16 %v2339, %v2338
    %v2352 = vpack.c.b16 %v2341, %v2340
    %v2353 = vpack.c.b16 %v2343, %v2342
    %v2354 = vpack.c.b16 %v2345, %v2344
    %v2355 = vpack.c.b16 %v2347, %v2346
    %2364 = vmatpush.bf16.msra.mxu0 %v2355
    %2365 = vmatpush.bf16.msra.mxu0 %v2354
    %2366 = vmatpush.bf16.msra.mxu0 %v2353
    %2367 = vmatpush.bf16.msra.mxu0 %v2352
    %2368 = vmatpush.bf16.msra.mxu0 %v2351
    %2369 = vmatpush.bf16.msra.mxu0 %v2350
    %2370 = vmatpush.bf16.msra.mxu0 %v2349
    %2371 = vmatpush.bf16.msra.mxu0 %v2348
    %2372 = vmatmul.bf16.gmra.mxu0 %v1826
    %v2373 = vpop.f32.mrf.mxu0
    %v2374 = vadd.f32 0.0, %v2373
    %v2375 = vpop.f32.mrf.mxu0
    %2376 = vdwg.mxu0
    %v2377 = vadd.f32 %v2298, %v2374
    %s2378 = scalar_lea.vmem [#allocation7], 448
    %v2379 = vld [vmem:[%s2378] sm:$0xf]
    %v2380 = vld [vmem:[%s2378 + $0x4] sm:$0xf]
    %v2381 = vld [vmem:[%s2378 + $0x8] sm:$0xf]
    %v2382 = vld [vmem:[%s2378 + $0xc] sm:$0xf]
    %v2383 = vld [vmem:[%s2378 + $0x10] sm:$0xf]
    %v2384 = vld [vmem:[%s2378 + $0x14] sm:$0xf]
    %v2385 = vld [vmem:[%s2378 + $0x18] sm:$0xf]
    %v2386 = vld [vmem:[%s2378 + $0x1c] sm:$0xf]
    %v2387 = vld [vmem:[%s2378 + $0x20] sm:$0xf]
    %v2388 = vld [vmem:[%s2378 + $0x24] sm:$0xf]
    %v2389 = vld [vmem:[%s2378 + $0x28] sm:$0xf]
    %v2390 = vld [vmem:[%s2378 + $0x2c] sm:$0xf]
    %v2391 = vld [vmem:[%s2378 + $0x30] sm:$0xf]
    %v2392 = vld [vmem:[%s2378 + $0x34] sm:$0xf]
    %v2393 = vld [vmem:[%s2378 + $0x38] sm:$0xf]
    %v2394 = vld [vmem:[%s2378 + $0x3c] sm:$0xf]
    %v2411 = vunpack.c.l.b16 %v2379
    %v2412 = vunpack.c.l.b16 %v2380
    %v2413 = vunpack.c.l.b16 %v2381
    %v2414 = vunpack.c.l.b16 %v2382
    %v2415 = vunpack.c.l.b16 %v2383
    %v2416 = vunpack.c.l.b16 %v2384
    %v2417 = vunpack.c.l.b16 %v2385
    %v2418 = vunpack.c.l.b16 %v2386
    %v2419 = vunpack.c.l.b16 %v2387
    %v2420 = vunpack.c.l.b16 %v2388
    %v2421 = vunpack.c.l.b16 %v2389
    %v2422 = vunpack.c.l.b16 %v2390
    %v2423 = vunpack.c.l.b16 %v2391
    %v2424 = vunpack.c.l.b16 %v2392
    %v2425 = vunpack.c.l.b16 %v2393
    %v2426 = vunpack.c.l.b16 %v2394
    %v2427 = vpack.c.b16 %v2412, %v2411
    %v2428 = vpack.c.b16 %v2414, %v2413
    %v2429 = vpack.c.b16 %v2416, %v2415
    %v2430 = vpack.c.b16 %v2418, %v2417
    %v2431 = vpack.c.b16 %v2420, %v2419
    %v2432 = vpack.c.b16 %v2422, %v2421
    %v2433 = vpack.c.b16 %v2424, %v2423
    %v2434 = vpack.c.b16 %v2426, %v2425
    %2443 = vmatpush.bf16.msra.mxu0 %v2434
    %2444 = vmatpush.bf16.msra.mxu0 %v2433
    %2445 = vmatpush.bf16.msra.mxu0 %v2432
    %2446 = vmatpush.bf16.msra.mxu0 %v2431
    %2447 = vmatpush.bf16.msra.mxu0 %v2430
    %2448 = vmatpush.bf16.msra.mxu0 %v2429
    %2449 = vmatpush.bf16.msra.mxu0 %v2428
    %2450 = vmatpush.bf16.msra.mxu0 %v2427
    %2451 = vmatmul.bf16.gmra.mxu0 %v1827
    %v2452 = vpop.f32.mrf.mxu0
    %v2453 = vadd.f32 0.0, %v2452
    %v2454 = vpop.f32.mrf.mxu0
    %2455 = vdwg.mxu0
    %v2456 = vadd.f32 %v2377, %v2453
    %v2457 = vld [vmem:[%s4] sm:$0x1]
    %v2459 = vperm.slane %v2457, 0
    %v2461 = vadd.f32 %v2456, %v2459
    %2462 = vst [vmem:[#allocation8] sm:$0xff] %v2461
    // Predicated region
    $region34: #{tpu_custom_call.1} parent=1 // pred_check
      _
    $region35: #{tpu_custom_call.1} parent=1 // pred_check_branch
      %2464 = sbr.rel (0) target = $region37
    $region36: #{tpu_custom_call.1} parent=1 // pred_region
      %2466 = vsyncadd [#allocation4], 0
      %s2468 = sshll.u32 [#allocation8], 4
      %s2469 = int_to_ptr.vmem [resolvable:$true] %s2468
      %s2470 = sshll.u32 %s5, 4
      %s2471 = int_to_ptr.hbm [resolvable:$true] %s2470
      %2473 = dma.vmem_to_hbm [thread:$0]  %s2469, 128, %s2471, [#allocation4]
    $region37: #{tpu_custom_call.1} parent=1 // pred_fallthru
      _
    // Predicated region
    $region38: #{tpu_custom_call.1} parent=1 // pred_check
      _
    $region39: #{tpu_custom_call.1} parent=1 // pred_check_branch
      %2475 = sbr.rel (0) target = $region41
    $region40: #{tpu_custom_call.1} parent=1 // pred_region
      %2477 = dma.done [#allocation4], 128
    $region41: #{tpu_custom_call.1} parent=1 // pred_fallthru
      _
    %2478 = vsyncpa [#allocation3], 1
    %2479 = vsyncpa [#allocation6], 1
    %2480 = vsyncpa [#allocation4], 1

</llo_original>
